<compile_context>
chip_gen: v7x
topology: tpu7x:2x2x1
jax: 0.10.0
libtpu: 0.0.40
codegen_flags: <defaults>
</compile_context>

<pallas_src>
import jax
import jax.numpy as jnp
from jax import lax
from jax.experimental import pallas as pl
from jax.experimental.pallas import tpu as pltpu


H1 = 400    # logical hidden-1 width  (nn.Linear(d_in, 400))
H2 = 300    # logical hidden-2 width  (nn.Linear(400, 300))
H1P = 512   # hidden-1 padded to a multiple of 128 lanes (aligned merged split)
H2P = 384   # hidden-2 padded to 3*128 lanes (unmasked VPU/XLU work)


def _critic_kernel(x_ref, u_ref,
                   w14x_ref, w14u_ref, b14_ref,
                   w2_ref, b2_ref,
                   w5_ref, b5_ref,
                   w36_ref, b36_ref,
                   q_ref):
    """One batch tile: both twin-Q heads, fused first layer, VPU output heads."""
    xb = x_ref[...].astype(jnp.bfloat16)
    ub = u_ref[...].astype(jnp.bfloat16)

    # --- fused layer 1 (l1 & l4): two accumulating bf16 MXU dots (x-part + u-part),
    #     f32 accumulation; bias + relu in f32 on the VPU.
    hg = (jnp.dot(xb, w14x_ref[...], preferred_element_type=jnp.float32)
          + jnp.dot(ub, w14u_ref[...], preferred_element_type=jnp.float32))
    hg = jnp.maximum(hg + b14_ref[...], 0.0)

    h = hg[:, :H1P].astype(jnp.bfloat16)          # lane-aligned split (512 | 512)
    g = hg[:, H1P:].astype(jnp.bfloat16)

    # --- layer 2 per head (bf16 operands, f32 accumulation on the MXU).
    h2 = jnp.maximum(
        jnp.dot(h, w2_ref[...], preferred_element_type=jnp.float32) + b2_ref[...],
        0.0)
    g2 = jnp.maximum(
        jnp.dot(g, w5_ref[...], preferred_element_type=jnp.float32) + b5_ref[...],
        0.0)

    # --- final 300(->384) -> 1 projections: broadcast-mul + lane reduction
    #     (VPU/XLU); padded lanes are exact zeros so the reduce is exact.
    w36 = w36_ref[...]                            # [2, H2P] f32
    q1 = jnp.sum(h2 * w36[0:1, :], axis=-1, keepdims=True) + b36_ref[:, 0:1]
    q2 = jnp.sum(g2 * w36[1:2, :], axis=-1, keepdims=True) + b36_ref[:, 1:2]

    # Single merged [tm, 2] store (lane-select instead of two partial stores).
    lanes = lax.broadcasted_iota(jnp.int32, (q1.shape[0], 2), 1)
    q_ref[...] = jnp.where(lanes == 0, q1, q2)


def _choose_tile(B, block_m):
    """Batch-tile size: single tile for small B, otherwise >=2 lane-aligned tiles
    (so the parallel grid axis can shard across v7x's two TensorCores)."""
    if B <= 256:
        return B                                   # full-dim block is always legal
    half = pl.cdiv(B, 2)
    half = ((half + 127) // 128) * 128             # round up to 128 sublanes
    return min(block_m, half)


def critic_forward(x, u, packed, *, block_m=1024):
    """x: [B, state_dim], u: [B, action_dim]; returns (q1, q2), each [B, 1].

    block_m defaults to 1024 (safe on v5e/v6e/v7x with a 32 MiB VMEM limit);
    on v6e it can be raised to 2048 if desired.
    """
    B, sd = x.shape
    _, ad = u.shape
    x = x.astype(x.dtype)   # x/u may be f32 or bf16; kernel casts to bf16 itself
    tm = _choose_tile(B, block_m)
    grid = (pl.cdiv(B, tm),)

    weights = (packed["w14_x"], packed["w14_u"], packed["b14"],
               packed["w2"], packed["b2"],
               packed["w5"], packed["b5"],
               packed["w36"], packed["b36"])

    # Activation tiles stream through the grid; weights use constant index_maps
    # so they are DMA'd into VMEM once and stay resident across all grid steps.
    in_specs = [pl.BlockSpec((tm, sd), lambda i: (i, 0)),
                pl.BlockSpec((tm, ad), lambda i: (i, 0))]
    in_specs += [pl.BlockSpec(w.shape, lambda i: (0, 0)) for w in weights]
    out_specs = pl.BlockSpec((tm, 2), lambda i: (i, 0))

    param_bytes = int(sum(int(w.size) * w.dtype.itemsize for w in weights))
    act_bytes = int(B * sd * x.dtype.itemsize + B * ad * u.dtype.itemsize)
    cost = pl.CostEstimate(
        flops=int(4 * B * ((sd + ad) * H1 + H1 * H2 + H2)),
        transcendentals=0,
        bytes_accessed=int(act_bytes + B * 2 * 4 + param_bytes),
    )

    q = pl.pallas_call(
        _critic_kernel,
        grid=grid,
        in_specs=in_specs,
        out_specs=out_specs,
        out_shape=jax.ShapeDtypeStruct((B, 2), jnp.float32),
        compiler_params=pltpu.CompilerParams(
            dimension_semantics=("parallel",),      # megacore split on v7x
            vmem_limit_bytes=32 * 1024 * 1024),     # tm=1024 fits (~11 MiB peak)
        cost_estimate=cost,
    )(x, u, *weights)

    return q[:, 0:1], q[:, 1:2]


def init_critic_params(key, state_dim, action_dim):
    """PyTorch-default-style init (U(-k, k), k=1/sqrt(fan_in)); weights [in, out]."""
    d_in = state_dim + action_dim
    dims = [(d_in, H1), (H1, H2), (H2, 1),   # l1, l2, l3
            (d_in, H1), (H1, H2), (H2, 1)]   # l4, l5, l6
    raw = {}
    for idx, (fi, fo) in enumerate(dims, start=1):
        key, kw, kb = jax.random.split(key, 3)
        bound = 1.0 / jnp.sqrt(jnp.float32(fi))
        raw[f"w{idx}"] = jax.random.uniform(kw, (fi, fo), jnp.float32, -bound, bound)
        raw[f"b{idx}"] = jax.random.uniform(kb, (1, fo), jnp.float32, -bound, bound)
    return raw


def pack_critic_params(raw, state_dim):
    """Pack raw per-layer params into the kernel layout (split/merged/padded)."""
    d_in = raw["w1"].shape[0]
    action_dim = d_in - state_dim

    # Merged layer-1 weight, split row-wise into the x-part and the u-part.
    w14_x = jnp.zeros((state_dim, 2 * H1P), jnp.float32)
    w14_x = (w14_x.at[:, :H1].set(raw["w1"][:state_dim])
                  .at[:, H1P:H1P + H1].set(raw["w4"][:state_dim]))
    w14_u = jnp.zeros((action_dim, 2 * H1P), jnp.float32)
    w14_u = (w14_u.at[:, :H1].set(raw["w1"][state_dim:])
                  .at[:, H1P:H1P + H1].set(raw["w4"][state_dim:]))
    b14 = jnp.zeros((1, 2 * H1P), jnp.float32)
    b14 = b14.at[:, :H1].set(raw["b1"]).at[:, H1P:H1P + H1].set(raw["b4"])

    # Layer-2 weights padded (rows 400->512, cols 300->384); pads are exact zeros.
    w2p = jnp.zeros((H1P, H2P), jnp.float32).at[:H1, :H2].set(raw["w2"])
    w5p = jnp.zeros((H1P, H2P), jnp.float32).at[:H1, :H2].set(raw["w5"])
    b2p = jnp.zeros((1, H2P), jnp.float32).at[:, :H2].set(raw["b2"])
    b5p = jnp.zeros((1, H2P), jnp.float32).at[:, :H2].set(raw["b5"])

    # Output projections stacked as [2, H2P] (f32, VPU path).
    w36 = jnp.zeros((2, H2P), jnp.float32)
    w36 = w36.at[0, :H2].set(raw["w3"][:, 0]).at[1, :H2].set(raw["w6"][:, 0])
    b36 = jnp.concatenate([raw["b3"], raw["b6"]], axis=1)        # [1, 2]

    return {
        "w14_x": w14_x.astype(jnp.bfloat16),
        "w14_u": w14_u.astype(jnp.bfloat16),
        "b14": b14,
        "w2": w2p.astype(jnp.bfloat16), "b2": b2p,
        "w5": w5p.astype(jnp.bfloat16), "b5": b5p,
        "w36": w36, "b36": b36,
    }


def critic_forward_ref_f32(x, u, raw):
    """Pure-f32 JAX reference (semantics of the PyTorch module)."""
    xu = jnp.concatenate([x, u], axis=1)
    h = jnp.maximum(xu @ raw["w1"] + raw["b1"], 0.0)
    h = jnp.maximum(h @ raw["w2"] + raw["b2"], 0.0)
    q1 = h @ raw["w3"] + raw["b3"]
    g = jnp.maximum(xu @ raw["w4"] + raw["b4"], 0.0)
    g = jnp.maximum(g @ raw["w5"] + raw["b5"], 0.0)
    q2 = g @ raw["w6"] + raw["b6"]
    return q1, q2


def critic_forward_ref_bf16(x, u, raw):
    """Reference mimicking the kernel arithmetic (bf16 dot operands, f32 accumulate)."""
    bf = jnp.bfloat16

    def lin(a, w, b):
        return jnp.dot(a.astype(bf), w.astype(bf),
                       preferred_element_type=jnp.float32) + b

    xu = jnp.concatenate([x, u], axis=1)
    h = jnp.maximum(lin(xu, raw["w1"], raw["b1"]), 0.0)
    h = jnp.maximum(lin(h, raw["w2"], raw["b2"]), 0.0)
    q1 = h @ raw["w3"] + raw["b3"]                 # final projection stays f32
    g = jnp.maximum(lin(xu, raw["w4"], raw["b4"]), 0.0)
    g = jnp.maximum(lin(g, raw["w5"], raw["b5"]), 0.0)
    q2 = g @ raw["w6"] + raw["b6"]
    return q1, q2


if __name__ == "__main__":
    state_dim, action_dim = 16, 8
    key = jax.random.PRNGKey(0)
    kx, ku, kp, kx2, ku2 = jax.random.split(key, 5)

    raw = init_critic_params(kp, state_dim, action_dim)
    packed = pack_critic_params(raw, state_dim)

    # --- small-shape smoke test (B=2) ---
    x = jax.random.normal(kx, (2, state_dim), jnp.float32)
    u = jax.random.normal(ku, (2, action_dim), jnp.float32)
    q1, q2 = critic_forward(x, u, packed)
    jax.block_until_ready((q1, q2))

    r1, r2 = critic_forward_ref_bf16(x, u, raw)
    f1, f2 = critic_forward_ref_f32(x, u, raw)
    assert q1.shape == (2, 1) and q2.shape == (2, 1)
    assert jnp.allclose(q1, r1, atol=2e-3, rtol=2e-3)
    assert jnp.allclose(q2, r2, atol=2e-3, rtol=2e-3)
    assert jnp.allclose(q1, f1, atol=5e-2, rtol=5e-2)
    assert jnp.allclose(q2, f2, atol=5e-2, rtol=5e-2)

    # --- larger batch: exercises the 2-step tiled grid and a partial final tile ---
    Bb = 1000
    xb = jax.random.normal(kx2, (Bb, state_dim), jnp.float32)
    ub = jax.random.normal(ku2, (Bb, action_dim), jnp.float32)
    q1b, q2b = critic_forward(xb, ub, packed)
    jax.block_until_ready((q1b, q2b))

    r1b, r2b = critic_forward_ref_bf16(xb, ub, raw)
    assert q1b.shape == (Bb, 1) and q2b.shape == (Bb, 1)
    assert jnp.allclose(q1b, r1b, atol=2e-3, rtol=2e-3)
    assert jnp.allclose(q2b, r2b, atol=2e-3, rtol=2e-3)

    print("KERNEL_OK")
</pallas_src>

<mosaic_0001>
module attributes {stable_mosaic.version = 11 : i64} {
  func.func @_critic_kernel(%arg0: i32, %arg1: memref<2x16xf32, #tpu.memory_space<vmem>>, %arg2: memref<2x8xf32, #tpu.memory_space<vmem>>, %arg3: memref<16x1024xbf16, #tpu.memory_space<vmem>>, %arg4: memref<8x1024xbf16, #tpu.memory_space<vmem>>, %arg5: memref<1x1024xf32, #tpu.memory_space<vmem>>, %arg6: memref<512x384xbf16, #tpu.memory_space<vmem>>, %arg7: memref<1x384xf32, #tpu.memory_space<vmem>>, %arg8: memref<512x384xbf16, #tpu.memory_space<vmem>>, %arg9: memref<1x384xf32, #tpu.memory_space<vmem>>, %arg10: memref<2x384xf32, #tpu.memory_space<vmem>>, %arg11: memref<1x2xf32, #tpu.memory_space<vmem>>, %arg12: memref<2x2xf32, #tpu.memory_space<vmem>>) attributes {dimension_semantics = [#tpu.dimension_semantics<parallel>], iteration_bounds = array<i64: 1>, scalar_prefetch = 0 : i64, scratch_operands = 0 : i64, tpu.core_type = #tpu.core_type<tc>, window_params = [{transform_indices = @transform_0, window_bounds = array<i64: 2, 16>}, {transform_indices = @transform_1, window_bounds = array<i64: 2, 8>}, {pipeline_mode = #tpu.pipeline_mode<synchronous>, transform_indices = @transform_2, window_bounds = array<i64: 16, 1024>}, {pipeline_mode = #tpu.pipeline_mode<synchronous>, transform_indices = @transform_3, window_bounds = array<i64: 8, 1024>}, {pipeline_mode = #tpu.pipeline_mode<synchronous>, transform_indices = @transform_4, window_bounds = array<i64: 1, 1024>}, {pipeline_mode = #tpu.pipeline_mode<synchronous>, transform_indices = @transform_5, window_bounds = array<i64: 512, 384>}, {pipeline_mode = #tpu.pipeline_mode<synchronous>, transform_indices = @transform_6, window_bounds = array<i64: 1, 384>}, {pipeline_mode = #tpu.pipeline_mode<synchronous>, transform_indices = @transform_7, window_bounds = array<i64: 512, 384>}, {pipeline_mode = #tpu.pipeline_mode<synchronous>, transform_indices = @transform_8, window_bounds = array<i64: 1, 384>}, {pipeline_mode = #tpu.pipeline_mode<synchronous>, transform_indices = @transform_9, window_bounds = array<i64: 2, 384>}, {pipeline_mode = #tpu.pipeline_mode<synchronous>, transform_indices = @transform_10, window_bounds = array<i64: 1, 2>}, {transform_indices = @transform_11, window_bounds = array<i64: 2, 2>}]} {
    %c0 = arith.constant 0 : index
    %c0_0 = arith.constant 0 : index
    %0 = vector.load %arg1[%c0, %c0_0] : memref<2x16xf32, #tpu.memory_space<vmem>>, vector<2x16xf32>
    %1 = arith.truncf %0 : vector<2x16xf32> to vector<2x16xbf16>
    %c0_1 = arith.constant 0 : index
    %c0_2 = arith.constant 0 : index
    %2 = vector.load %arg2[%c0_1, %c0_2] : memref<2x8xf32, #tpu.memory_space<vmem>>, vector<2x8xf32>
    %3 = arith.truncf %2 : vector<2x8xf32> to vector<2x8xbf16>
    %c0_3 = arith.constant 0 : index
    %c0_4 = arith.constant 0 : index
    %4 = vector.load %arg3[%c0_3, %c0_4] : memref<16x1024xbf16, #tpu.memory_space<vmem>>, vector<16x1024xbf16>
    %cst = arith.constant dense<0.000000e+00> : vector<2x1024xf32>
    %5 = tpu.matmul %1, %4, %cst {dimension_numbers = #tpu.dot_dimension_numbers<[1], [0], [0], [1], [0, 0, 1, 1], [], []>} : vector<2x16xbf16>, vector<16x1024xbf16>, vector<2x1024xf32> -> vector<2x1024xf32>
    %c0_5 = arith.constant 0 : index
    %c0_6 = arith.constant 0 : index
    %6 = vector.load %arg4[%c0_5, %c0_6] : memref<8x1024xbf16, #tpu.memory_space<vmem>>, vector<8x1024xbf16>
    %cst_7 = arith.constant dense<0.000000e+00> : vector<2x1024xf32>
    %7 = tpu.matmul %3, %6, %cst_7 {dimension_numbers = #tpu.dot_dimension_numbers<[1], [0], [0], [1], [0, 0, 1, 1], [], []>} : vector<2x8xbf16>, vector<8x1024xbf16>, vector<2x1024xf32> -> vector<2x1024xf32>
    %8 = arith.addf %5, %7 : vector<2x1024xf32>
    %c0_8 = arith.constant 0 : index
    %c0_9 = arith.constant 0 : index
    %9 = vector.load %arg5[%c0_8, %c0_9] : memref<1x1024xf32, #tpu.memory_space<vmem>>, vector<1x1024xf32>
    %10 = vector.broadcast %9 : vector<1x1024xf32> to vector<2x1024xf32>
    %11 = arith.addf %8, %10 : vector<2x1024xf32>
    %cst_10 = arith.constant 0.000000e+00 : f32
    %12 = vector.broadcast %cst_10 : f32 to vector<2x1024xf32>
    %13 = arith.maximumf %11, %12 : vector<2x1024xf32>
    %14 = vector.extract_strided_slice %13 {offsets = [0, 0], sizes = [2, 512], strides = [1, 1]} : vector<2x1024xf32> to vector<2x512xf32>
    %15 = arith.truncf %14 : vector<2x512xf32> to vector<2x512xbf16>
    %16 = vector.extract_strided_slice %13 {offsets = [0, 512], sizes = [2, 512], strides = [1, 1]} : vector<2x1024xf32> to vector<2x512xf32>
    %17 = arith.truncf %16 : vector<2x512xf32> to vector<2x512xbf16>
    %c0_11 = arith.constant 0 : index
    %c0_12 = arith.constant 0 : index
    %18 = vector.load %arg6[%c0_11, %c0_12] : memref<512x384xbf16, #tpu.memory_space<vmem>>, vector<512x384xbf16>
    %cst_13 = arith.constant dense<0.000000e+00> : vector<2x384xf32>
    %19 = tpu.matmul %15, %18, %cst_13 {dimension_numbers = #tpu.dot_dimension_numbers<[1], [0], [0], [1], [0, 0, 1, 1], [], []>} : vector<2x512xbf16>, vector<512x384xbf16>, vector<2x384xf32> -> vector<2x384xf32>
    %c0_14 = arith.constant 0 : index
    %c0_15 = arith.constant 0 : index
    %20 = vector.load %arg7[%c0_14, %c0_15] : memref<1x384xf32, #tpu.memory_space<vmem>>, vector<1x384xf32>
    %21 = vector.broadcast %20 : vector<1x384xf32> to vector<2x384xf32>
    %22 = arith.addf %19, %21 : vector<2x384xf32>
    %cst_16 = arith.constant 0.000000e+00 : f32
    %23 = vector.broadcast %cst_16 : f32 to vector<2x384xf32>
    %24 = arith.maximumf %22, %23 : vector<2x384xf32>
    %c0_17 = arith.constant 0 : index
    %c0_18 = arith.constant 0 : index
    %25 = vector.load %arg8[%c0_17, %c0_18] : memref<512x384xbf16, #tpu.memory_space<vmem>>, vector<512x384xbf16>
    %cst_19 = arith.constant dense<0.000000e+00> : vector<2x384xf32>
    %26 = tpu.matmul %17, %25, %cst_19 {dimension_numbers = #tpu.dot_dimension_numbers<[1], [0], [0], [1], [0, 0, 1, 1], [], []>} : vector<2x512xbf16>, vector<512x384xbf16>, vector<2x384xf32> -> vector<2x384xf32>
    %c0_20 = arith.constant 0 : index
    %c0_21 = arith.constant 0 : index
    %27 = vector.load %arg9[%c0_20, %c0_21] : memref<1x384xf32, #tpu.memory_space<vmem>>, vector<1x384xf32>
    %28 = vector.broadcast %27 : vector<1x384xf32> to vector<2x384xf32>
    %29 = arith.addf %26, %28 : vector<2x384xf32>
    %cst_22 = arith.constant 0.000000e+00 : f32
    %30 = vector.broadcast %cst_22 : f32 to vector<2x384xf32>
    %31 = arith.maximumf %29, %30 : vector<2x384xf32>
    %c0_23 = arith.constant 0 : index
    %c0_24 = arith.constant 0 : index
    %32 = vector.load %arg10[%c0_23, %c0_24] : memref<2x384xf32, #tpu.memory_space<vmem>>, vector<2x384xf32>
    %33 = vector.extract_strided_slice %32 {offsets = [0, 0], sizes = [1, 384], strides = [1, 1]} : vector<2x384xf32> to vector<1x384xf32>
    %34 = vector.broadcast %33 : vector<1x384xf32> to vector<2x384xf32>
    %35 = arith.mulf %24, %34 : vector<2x384xf32>
    %cst_25 = arith.constant dense<0.000000e+00> : vector<2xf32>
    %36 = vector.multi_reduction <add>, %35, %cst_25 [1] : vector<2x384xf32> to vector<2xf32>
    %37 = vector.shape_cast %36 : vector<2xf32> to vector<2x1xf32>
    %c0_26 = arith.constant 0 : index
    %c0_27 = arith.constant 0 : index
    %38 = vector.load %arg11[%c0_26, %c0_27] : memref<1x2xf32, #tpu.memory_space<vmem>>, vector<1x1xf32>
    %39 = vector.broadcast %38 : vector<1x1xf32> to vector<2x1xf32>
    %40 = arith.addf %37, %39 : vector<2x1xf32>
    %41 = vector.extract_strided_slice %32 {offsets = [1, 0], sizes = [1, 384], strides = [1, 1]} : vector<2x384xf32> to vector<1x384xf32>
    %42 = vector.broadcast %41 : vector<1x384xf32> to vector<2x384xf32>
    %43 = arith.mulf %31, %42 : vector<2x384xf32>
    %cst_28 = arith.constant dense<0.000000e+00> : vector<2xf32>
    %44 = vector.multi_reduction <add>, %43, %cst_28 [1] : vector<2x384xf32> to vector<2xf32>
    %45 = vector.shape_cast %44 : vector<2xf32> to vector<2x1xf32>
    %c0_29 = arith.constant 0 : index
    %c1 = arith.constant 1 : index
    %46 = vector.load %arg11[%c0_29, %c1] : memref<1x2xf32, #tpu.memory_space<vmem>>, vector<1x1xf32>
    %47 = vector.broadcast %46 : vector<1x1xf32> to vector<2x1xf32>
    %48 = arith.addf %45, %47 : vector<2x1xf32>
    %49 = tpu.iota {dimensions = array<i32: 1>} : vector<2x2xi32>
    %c0_i32 = arith.constant 0 : i32
    %50 = vector.broadcast %c0_i32 : i32 to vector<2x2xi32>
    %51 = arith.cmpi eq, %49, %50 : vector<2x2xi32>
    %52 = vector.shape_cast %40 : vector<2x1xf32> to vector<2x1xf32>
    %53 = vector.broadcast %52 : vector<2x1xf32> to vector<2x2xf32>
    %54 = vector.shape_cast %48 : vector<2x1xf32> to vector<2x1xf32>
    %55 = vector.broadcast %54 : vector<2x1xf32> to vector<2x2xf32>
    %56 = arith.select %51, %53, %55 : vector<2x2xi1>, vector<2x2xf32>
    %c0_30 = arith.constant 0 : index
    %c0_31 = arith.constant 0 : index
    %57 = vector.load %arg12[%c0_30, %c0_31] : memref<2x2xf32, #tpu.memory_space<vmem>>, vector<2x2xf32>
    tpu.vector_store %arg12[%c0_30, %c0_31], %56 {strides = array<i32>} : memref<2x2xf32, #tpu.memory_space<vmem>>, vector<2x2xf32>,
    return
  }
  func.func @transform_0(%arg0: i32) -> (i32, i32) {
    %c0_i32 = arith.constant 0 : i32
    %c0_i32_0 = arith.constant 0 : i32
    return %arg0, %c0_i32 : i32, i32
  }
  func.func @transform_1(%arg0: i32) -> (i32, i32) {
    %c0_i32 = arith.constant 0 : i32
    %c0_i32_0 = arith.constant 0 : i32
    return %arg0, %c0_i32 : i32, i32
  }
  func.func @transform_2(%arg0: i32) -> (i32, i32) {
    %c0_i32 = arith.constant 0 : i32
    %c0_i32_0 = arith.constant 0 : i32
    %c0_i32_1 = arith.constant 0 : i32
    return %c0_i32, %c0_i32_0 : i32, i32
  }
  func.func @transform_3(%arg0: i32) -> (i32, i32) {
    %c0_i32 = arith.constant 0 : i32
    %c0_i32_0 = arith.constant 0 : i32
    %c0_i32_1 = arith.constant 0 : i32
    return %c0_i32, %c0_i32_0 : i32, i32
  }
  func.func @transform_4(%arg0: i32) -> (i32, i32) {
    %c0_i32 = arith.constant 0 : i32
    %c0_i32_0 = arith.constant 0 : i32
    %c0_i32_1 = arith.constant 0 : i32
    return %c0_i32, %c0_i32_0 : i32, i32
  }
  func.func @transform_5(%arg0: i32) -> (i32, i32) {
    %c0_i32 = arith.constant 0 : i32
    %c0_i32_0 = arith.constant 0 : i32
    %c0_i32_1 = arith.constant 0 : i32
    return %c0_i32, %c0_i32_0 : i32, i32
  }
  func.func @transform_6(%arg0: i32) -> (i32, i32) {
    %c0_i32 = arith.constant 0 : i32
    %c0_i32_0 = arith.constant 0 : i32
    %c0_i32_1 = arith.constant 0 : i32
    return %c0_i32, %c0_i32_0 : i32, i32
  }
  func.func @transform_7(%arg0: i32) -> (i32, i32) {
    %c0_i32 = arith.constant 0 : i32
    %c0_i32_0 = arith.constant 0 : i32
    %c0_i32_1 = arith.constant 0 : i32
    return %c0_i32, %c0_i32_0 : i32, i32
  }
  func.func @transform_8(%arg0: i32) -> (i32, i32) {
    %c0_i32 = arith.constant 0 : i32
    %c0_i32_0 = arith.constant 0 : i32
    %c0_i32_1 = arith.constant 0 : i32
    return %c0_i32, %c0_i32_0 : i32, i32
  }
  func.func @transform_9(%arg0: i32) -> (i32, i32) {
    %c0_i32 = arith.constant 0 : i32
    %c0_i32_0 = arith.constant 0 : i32
    %c0_i32_1 = arith.constant 0 : i32
    return %c0_i32, %c0_i32_0 : i32, i32
  }
  func.func @transform_10(%arg0: i32) -> (i32, i32) {
    %c0_i32 = arith.constant 0 : i32
    %c0_i32_0 = arith.constant 0 : i32
    %c0_i32_1 = arith.constant 0 : i32
    return %c0_i32, %c0_i32_0 : i32, i32
  }
  func.func @transform_11(%arg0: i32) -> (i32, i32) {
    %c0_i32 = arith.constant 0 : i32
    %c0_i32_0 = arith.constant 0 : i32
    return %arg0, %c0_i32 : i32, i32
  }
}

</mosaic_0001>

<llo_original>
// kernel: tpu_custom_call.1
$region0: #{tpu_custom_call.1}
  #allocation0 [shape = 'u32[]', space=smem, size = 0x4, offset = 0x4, fixed_abs, tag = 'smem constant byte address 0x4 - core index']
  #allocation1 [shape = 'u32[144,128]{1,0:T(1,128)}', space=vmem, size = 0x12000, scoped, tag = 'internal scratch']
  %s0 = inlined_call_operand.hbm [shape: f32[2,16], index: 0, kind: input, shape index: {}]
  %s1 = inlined_call_operand.hbm [shape: f32[2,8], index: 1, kind: input, shape index: {}]
  %s2 = inlined_call_operand.hbm [shape: bf16[16,1024], index: 2, kind: input, shape index: {}]
  %s3 = inlined_call_operand.hbm [shape: bf16[8,1024], index: 3, kind: input, shape index: {}]
  %s4 = inlined_call_operand.vmem [shape: f32[1,1024], index: 4, kind: input, shape index: {}]
  %s5 = inlined_call_operand.hbm [shape: bf16[512,384], index: 5, kind: input, shape index: {}]
  %s6 = inlined_call_operand.vmem [shape: f32[1,384], index: 6, kind: input, shape index: {}]
  %s7 = inlined_call_operand.hbm [shape: bf16[512,384], index: 7, kind: input, shape index: {}]
  %s8 = inlined_call_operand.vmem [shape: f32[1,384], index: 8, kind: input, shape index: {}]
  %s9 = inlined_call_operand.vmem [shape: f32[2,384], index: 9, kind: input, shape index: {}]
  %s10 = inlined_call_operand.vmem [shape: f32[1,2], index: 10, kind: input, shape index: {}]
  %s11 = inlined_call_operand.hbm [shape: f32[2,2], index: 11, kind: output, shape index: {}]
  %s12 = sld [smem:[#allocation0]]
  $region78: #{tpu_custom_call.1} parent=0
    _
  %s14 = ssub.s32 1, %s12
  %s15 = scalar_select 0, %s14, %s12
  $region1: #{tpu_custom_call.1} parent=0
    #allocation2 [shape = 'u8[1024]{0}', space=vmem, size = 0x400, scoped, tag = 'input window, operand 0, single buffered']
    #allocation3 [shape = 's32[1]{0}', space=sflag, size = 0x4, scoped, tag = 'scoped memory for tpu_custom_call.1']
    #allocation4 [shape = 's32[1]{0}', space=sflag, size = 0x4, scoped, tag = 'scoped memory for tpu_custom_call.1']
    #allocation5 [shape = 'u8[1024]{0}', space=vmem, size = 0x400, scoped, tag = 'input window, operand 1, single buffered']
    #allocation6 [shape = 's32[1]{0}', space=sflag, size = 0x4, scoped, tag = 'scoped memory for tpu_custom_call.1']
    #allocation7 [shape = 'u8[32768]{0}', space=vmem, size = 0x8000, scoped, tag = 'input window, operand 2, single buffered']
    #allocation8 [shape = 'u8[16384]{0}', space=vmem, size = 0x4000, scoped, tag = 'input window, operand 3, single buffered']
    #allocation9 [shape = 's32[1]{0}', space=sflag, size = 0x4, scoped, tag = 'scoped memory for tpu_custom_call.1']
    #allocation10 [shape = 'u8[393216]{0}', space=vmem, size = 0x60000, scoped, tag = 'input window, operand 5, single buffered']
    #allocation11 [shape = 'u8[393216]{0}', space=vmem, size = 0x60000, scoped, tag = 'input window, operand 7, single buffered']
    #allocation12 [shape = 's32[1]{0}', space=sflag, size = 0x4, scoped, tag = 'scoped memory for tpu_custom_call.1']
    #allocation13 [shape = 'u8[1024]{0}', space=vmem, size = 0x400, scoped, tag = 'output window, operand 0, single buffered']
    %16 = vsyncpa [#allocation3], 0
    %17 = vsyncpa [#allocation6], 0
    %18 = vsyncpa [#allocation9], 0
    %19 = vsyncpa [#allocation12], 0
    %20 = vsyncpa [#allocation4], 0
    // Predicated region
    $region2: #{tpu_custom_call.1} parent=1 // pred_check
      _
    $region3: #{tpu_custom_call.1} parent=1 // pred_check_branch
      %22 = sbr.rel (0) target = $region5
    $region4: #{tpu_custom_call.1} parent=1 // pred_region
      %s24 = ssub.s32 32, 32
      %25 = vsyncadd [#allocation3], %s24
      %s27 = sshll.u32 [#allocation2], 4
      %s28 = int_to_ptr.vmem [resolvable:$true] %s27
      %30 = dma.hbm_to_vmem [thread:$0]  %s0, 32, %s28, [#allocation3]
    $region5: #{tpu_custom_call.1} parent=1 // pred_fallthru
      _
    // Predicated region
    $region6: #{tpu_custom_call.1} parent=1 // pred_check
      _
    $region7: #{tpu_custom_call.1} parent=1 // pred_check_branch
      %32 = sbr.rel (0) target = $region9
    $region8: #{tpu_custom_call.1} parent=1 // pred_region
      %s34 = ssub.s32 32, 32
      %35 = vsyncadd [#allocation6], %s34
      %s37 = sshll.u32 [#allocation5], 4
      %s38 = int_to_ptr.vmem [resolvable:$true] %s37
      %40 = dma.hbm_to_vmem [thread:$0]  %s1, 32, %s38, [#allocation6]
    $region9: #{tpu_custom_call.1} parent=1 // pred_fallthru
      _
    // Predicated region
    $region10: #{tpu_custom_call.1} parent=1 // pred_check
      _
    $region11: #{tpu_custom_call.1} parent=1 // pred_check_branch
      %42 = sbr.rel (0) target = $region13
    $region12: #{tpu_custom_call.1} parent=1 // pred_region
      %s44 = ssub.s32 1024, 1024
      %45 = vsyncadd [#allocation6], %s44
      %s46 = sshll.u32 [#allocation7], 4
      %s47 = int_to_ptr.vmem [resolvable:$true] %s46
      %52 = dma.hbm_to_vmem [thread:$0]  %s2, 1024, %s47, [#allocation6], 512, 512, 32
    $region13: #{tpu_custom_call.1} parent=1 // pred_fallthru
      _
    // Predicated region
    $region14: #{tpu_custom_call.1} parent=1 // pred_check
      _
    $region15: #{tpu_custom_call.1} parent=1 // pred_check_branch
      %54 = sbr.rel (0) target = $region17
    $region16: #{tpu_custom_call.1} parent=1 // pred_region
      %s56 = ssub.s32 512, 512
      %57 = vsyncadd [#allocation9], %s56
      %s59 = sshll.u32 [#allocation8], 4
      %s60 = int_to_ptr.vmem [resolvable:$true] %s59
      %62 = dma.hbm_to_vmem [thread:$0]  %s3, 512, %s60, [#allocation9]
    $region17: #{tpu_custom_call.1} parent=1 // pred_fallthru
      _
    // Predicated region
    $region18: #{tpu_custom_call.1} parent=1 // pred_check
      _
    $region19: #{tpu_custom_call.1} parent=1 // pred_check_branch
      %64 = sbr.rel (0) target = $region21
    $region20: #{tpu_custom_call.1} parent=1 // pred_region
      _
    $region21: #{tpu_custom_call.1} parent=1 // pred_fallthru
      _
    // Predicated region
    $region22: #{tpu_custom_call.1} parent=1 // pred_check
      _
    $region23: #{tpu_custom_call.1} parent=1 // pred_check_branch
      %66 = sbr.rel (0) target = $region25
    $region24: #{tpu_custom_call.1} parent=1 // pred_region
      %s68 = ssub.s32 12288, 12288
      %69 = vsyncadd [#allocation9], %s68
      %s70 = sshll.u32 [#allocation10], 4
      %s71 = int_to_ptr.vmem [resolvable:$true] %s70
      %76 = dma.hbm_to_vmem [thread:$0]  %s5, 12288, %s71, [#allocation9], 192, 192, 12
    $region25: #{tpu_custom_call.1} parent=1 // pred_fallthru
      _
    // Predicated region
    $region26: #{tpu_custom_call.1} parent=1 // pred_check
      _
    $region27: #{tpu_custom_call.1} parent=1 // pred_check_branch
      %78 = sbr.rel (0) target = $region29
    $region28: #{tpu_custom_call.1} parent=1 // pred_region
      _
    $region29: #{tpu_custom_call.1} parent=1 // pred_fallthru
      _
    // Predicated region
    $region30: #{tpu_custom_call.1} parent=1 // pred_check
      _
    $region31: #{tpu_custom_call.1} parent=1 // pred_check_branch
      %80 = sbr.rel (0) target = $region33
    $region32: #{tpu_custom_call.1} parent=1 // pred_region
      %s82 = ssub.s32 12288, 12288
      %83 = vsyncadd [#allocation12], %s82
      %s84 = sshll.u32 [#allocation11], 4
      %s85 = int_to_ptr.vmem [resolvable:$true] %s84
      %90 = dma.hbm_to_vmem [thread:$0]  %s7, 12288, %s85, [#allocation12], 192, 192, 12
    $region33: #{tpu_custom_call.1} parent=1 // pred_fallthru
      _
    // Predicated region
    $region34: #{tpu_custom_call.1} parent=1 // pred_check
      _
    $region35: #{tpu_custom_call.1} parent=1 // pred_check_branch
      %92 = sbr.rel (0) target = $region37
    $region36: #{tpu_custom_call.1} parent=1 // pred_region
      _
    $region37: #{tpu_custom_call.1} parent=1 // pred_fallthru
      _
    // Predicated region
    $region38: #{tpu_custom_call.1} parent=1 // pred_check
      _
    $region39: #{tpu_custom_call.1} parent=1 // pred_check_branch
      %94 = sbr.rel (0) target = $region41
    $region40: #{tpu_custom_call.1} parent=1 // pred_region
      _
    $region41: #{tpu_custom_call.1} parent=1 // pred_fallthru
      _
    // Predicated region
    $region42: #{tpu_custom_call.1} parent=1 // pred_check
      _
    $region43: #{tpu_custom_call.1} parent=1 // pred_check_branch
      %96 = sbr.rel (0) target = $region45
    $region44: #{tpu_custom_call.1} parent=1 // pred_region
      _
    $region45: #{tpu_custom_call.1} parent=1 // pred_fallthru
      _
    // Predicated region
    $region46: #{tpu_custom_call.1} parent=1 // pred_check
      _
    $region47: #{tpu_custom_call.1} parent=1 // pred_check_branch
      %98 = sbr.rel (0) target = $region49
    $region48: #{tpu_custom_call.1} parent=1 // pred_region
      %99 = dma.done [#allocation3], 32
    $region49: #{tpu_custom_call.1} parent=1 // pred_fallthru
      _
    // Predicated region
    $region50: #{tpu_custom_call.1} parent=1 // pred_check
      _
    $region51: #{tpu_custom_call.1} parent=1 // pred_check_branch
      %101 = sbr.rel (0) target = $region53
    $region52: #{tpu_custom_call.1} parent=1 // pred_region
      %102 = dma.done [#allocation6], 32
    $region53: #{tpu_custom_call.1} parent=1 // pred_fallthru
      _
    // Predicated region
    $region54: #{tpu_custom_call.1} parent=1 // pred_check
      _
    $region55: #{tpu_custom_call.1} parent=1 // pred_check_branch
      %104 = sbr.rel (0) target = $region57
    $region56: #{tpu_custom_call.1} parent=1 // pred_region
      %105 = dma.done [#allocation6], 1024
    $region57: #{tpu_custom_call.1} parent=1 // pred_fallthru
      _
    // Predicated region
    $region58: #{tpu_custom_call.1} parent=1 // pred_check
      _
    $region59: #{tpu_custom_call.1} parent=1 // pred_check_branch
      %107 = sbr.rel (0) target = $region61
    $region60: #{tpu_custom_call.1} parent=1 // pred_region
      %108 = dma.done [#allocation9], 512
    $region61: #{tpu_custom_call.1} parent=1 // pred_fallthru
      _
    // Predicated region
    $region62: #{tpu_custom_call.1} parent=1 // pred_check
      _
    $region63: #{tpu_custom_call.1} parent=1 // pred_check_branch
      %110 = sbr.rel (0) target = $region65
    $region64: #{tpu_custom_call.1} parent=1 // pred_region
      %111 = dma.done [#allocation9], 12288
    $region65: #{tpu_custom_call.1} parent=1 // pred_fallthru
      _
    // Predicated region
    $region66: #{tpu_custom_call.1} parent=1 // pred_check
      _
    $region67: #{tpu_custom_call.1} parent=1 // pred_check_branch
      %113 = sbr.rel (0) target = $region69
    $region68: #{tpu_custom_call.1} parent=1 // pred_region
      %114 = dma.done [#allocation12], 12288
    $region69: #{tpu_custom_call.1} parent=1 // pred_fallthru
      _
    %v116 = vld [vmem:[#allocation2] sm:$0x3]
    %v117 = vpack.c.bf16 %v116, %v116
    %v118 = vld [vmem:[#allocation5] sm:$0x3]
    %v119 = vpack.c.bf16 %v118, %v118
    %v120 = vld [vmem:[#allocation7] sm:$0xff]
    %v121 = vld [vmem:[#allocation7 + $0x8] sm:$0xff]
    %v122 = vld [vmem:[#allocation7 + $0x10] sm:$0xff]
    %v123 = vld [vmem:[#allocation7 + $0x18] sm:$0xff]
    %v124 = vld [vmem:[#allocation7 + $0x20] sm:$0xff]
    %v125 = vld [vmem:[#allocation7 + $0x28] sm:$0xff]
    %v126 = vld [vmem:[#allocation7 + $0x30] sm:$0xff]
    %v127 = vld [vmem:[#allocation7 + $0x38] sm:$0xff]
    %v128 = vld [vmem:[#allocation8] sm:$0xff]
    %v129 = vld [vmem:[#allocation8 + $0x8] sm:$0xff]
    %v130 = vld [vmem:[#allocation8 + $0x10] sm:$0xff]
    %v131 = vld [vmem:[#allocation8 + $0x18] sm:$0xff]
    %v136 = vunpack.c.l.b16 %v128
    %v137 = vunpack.c.h.b16 %v128
    %v138 = vunpack.c.l.b16 %v129
    %v139 = vunpack.c.h.b16 %v129
    %v140 = vunpack.c.l.b16 %v130
    %v141 = vunpack.c.h.b16 %v130
    %v142 = vunpack.c.l.b16 %v131
    %v143 = vunpack.c.h.b16 %v131
    %v144 = vpack.c.b16 %v136, %v136
    %v145 = vpack.c.b16 %v137, %v137
    %v146 = vpack.c.b16 %v138, %v138
    %v147 = vpack.c.b16 %v139, %v139
    %v148 = vpack.c.b16 %v140, %v140
    %v149 = vpack.c.b16 %v141, %v141
    %v150 = vpack.c.b16 %v142, %v142
    %v151 = vpack.c.b16 %v143, %v143
    %vm152 = vcmask 64512
    %v154 = vsel %vm152, %v119, 0
    %vm156 = vcmask 1043456
    %v158 = vsel %vm156, %v144, 0
    %v161 = vsel %vm156, %v145, 0
    %v164 = vsel %vm156, %v146, 0
    %v167 = vsel %vm156, %v147, 0
    %v170 = vsel %vm156, %v148, 0
    %v173 = vsel %vm156, %v149, 0
    %v176 = vsel %vm156, %v150, 0
    %v179 = vsel %vm156, %v151, 0
    %181 = vmatprep.subr.bf16.mxu0 %v161
    %182 = vmatpush1.bf16.msra.mxu0 %v158
    %183 = vmatprep.subr.bf16.mxu0 0
    %184 = vmatpush1.bf16.msra.mxu0 0
    %185 = vmatprep.subr.bf16.mxu0 0
    %186 = vmatpush1.bf16.msra.mxu0 0
    %187 = vmatprep.subr.bf16.mxu0 0
    %188 = vmatpush1.bf16.msra.mxu0 0
    %189 = vmatprep.subr.bf16.mxu0 0
    %190 = vmatpush1.bf16.msra.mxu0 0
    %191 = vmatprep.subr.bf16.mxu0 0
    %192 = vmatpush1.bf16.msra.mxu0 0
    %193 = vmatprep.subr.bf16.mxu0 0
    %194 = vmatpush1.bf16.msra.mxu0 0
    %195 = vmatprep.subr.bf16.mxu0 0
    %196 = vmatpush1.bf16.msra.mxu0 0
    %197 = vmatprep.subr.bf16.mxu0 0
    %198 = vmatpush1.bf16.msra.mxu0 0
    %199 = vmatprep.subr.bf16.mxu0 0
    %200 = vmatpush1.bf16.msra.mxu0 0
    %201 = vmatprep.subr.bf16.mxu0 0
    %202 = vmatpush1.bf16.msra.mxu0 0
    %203 = vmatprep.subr.bf16.mxu0 0
    %204 = vmatpush1.bf16.msra.mxu0 0
    %205 = vmatprep.subr.bf16.mxu0 0
    %206 = vmatpush1.bf16.msra.mxu0 0
    %207 = vmatprep.subr.bf16.mxu0 0
    %208 = vmatpush1.bf16.msra.mxu0 0
    %209 = vmatprep.subr.bf16.mxu0 0
    %210 = vmatpush1.bf16.msra.mxu0 0
    %211 = vmatprep.subr.bf16.mxu0 0
    %212 = vmatpush1.bf16.msra.mxu0 0
    %213 = vmatprep.mubr.bf16.mxu0 0
    %214 = vmatmul.mubr.bf16.gmra.mrb[0].mxu0 %v154
    %v215 = vpop.f32.mrb[0].mxu0
    %v216 = vadd.f32 0.0, %v215
    %v217 = vpop.f32.mrb[0].mxu0
    %v218 = vadd.f32 0.0, %v217
    %v219 = vpop.f32.mrb[0].mxu0
    %v220 = vpop.f32.mrb[0].mxu0
    %221 = vdwg.mxu0
    %222 = vmatprep.subr.bf16.mxu0 %v167
    %223 = vmatpush1.bf16.msra.mxu0 %v164
    %224 = vmatprep.subr.bf16.mxu0 0
    %225 = vmatpush1.bf16.msra.mxu0 0
    %226 = vmatprep.subr.bf16.mxu0 0
    %227 = vmatpush1.bf16.msra.mxu0 0
    %228 = vmatprep.subr.bf16.mxu0 0
    %229 = vmatpush1.bf16.msra.mxu0 0
    %230 = vmatprep.subr.bf16.mxu0 0
    %231 = vmatpush1.bf16.msra.mxu0 0
    %232 = vmatprep.subr.bf16.mxu0 0
    %233 = vmatpush1.bf16.msra.mxu0 0
    %234 = vmatprep.subr.bf16.mxu0 0
    %235 = vmatpush1.bf16.msra.mxu0 0
    %236 = vmatprep.subr.bf16.mxu0 0
    %237 = vmatpush1.bf16.msra.mxu0 0
    %238 = vmatprep.subr.bf16.mxu0 0
    %239 = vmatpush1.bf16.msra.mxu0 0
    %240 = vmatprep.subr.bf16.mxu0 0
    %241 = vmatpush1.bf16.msra.mxu0 0
    %242 = vmatprep.subr.bf16.mxu0 0
    %243 = vmatpush1.bf16.msra.mxu0 0
    %244 = vmatprep.subr.bf16.mxu0 0
    %245 = vmatpush1.bf16.msra.mxu0 0
    %246 = vmatprep.subr.bf16.mxu0 0
    %247 = vmatpush1.bf16.msra.mxu0 0
    %248 = vmatprep.subr.bf16.mxu0 0
    %249 = vmatpush1.bf16.msra.mxu0 0
    %250 = vmatprep.subr.bf16.mxu0 0
    %251 = vmatpush1.bf16.msra.mxu0 0
    %252 = vmatprep.subr.bf16.mxu0 0
    %253 = vmatpush1.bf16.msra.mxu0 0
    %254 = vmatprep.mubr.bf16.mxu0 0
    %255 = vmatmul.mubr.bf16.gmra.mrb[0].mxu0 %v154
    %v256 = vpop.f32.mrb[0].mxu0
    %v257 = vadd.f32 0.0, %v256
    %v258 = vpop.f32.mrb[0].mxu0
    %v259 = vadd.f32 0.0, %v258
    %v260 = vpop.f32.mrb[0].mxu0
    %v261 = vpop.f32.mrb[0].mxu0
    %262 = vdwg.mxu0
    %263 = vmatprep.subr.bf16.mxu0 %v173
    %264 = vmatpush1.bf16.msra.mxu0 %v170
    %265 = vmatprep.subr.bf16.mxu0 0
    %266 = vmatpush1.bf16.msra.mxu0 0
    %267 = vmatprep.subr.bf16.mxu0 0
    %268 = vmatpush1.bf16.msra.mxu0 0
    %269 = vmatprep.subr.bf16.mxu0 0
    %270 = vmatpush1.bf16.msra.mxu0 0
    %271 = vmatprep.subr.bf16.mxu0 0
    %272 = vmatpush1.bf16.msra.mxu0 0
    %273 = vmatprep.subr.bf16.mxu0 0
    %274 = vmatpush1.bf16.msra.mxu0 0
    %275 = vmatprep.subr.bf16.mxu0 0
    %276 = vmatpush1.bf16.msra.mxu0 0
    %277 = vmatprep.subr.bf16.mxu0 0
    %278 = vmatpush1.bf16.msra.mxu0 0
    %279 = vmatprep.subr.bf16.mxu0 0
    %280 = vmatpush1.bf16.msra.mxu0 0
    %281 = vmatprep.subr.bf16.mxu0 0
    %282 = vmatpush1.bf16.msra.mxu0 0
    %283 = vmatprep.subr.bf16.mxu0 0
    %284 = vmatpush1.bf16.msra.mxu0 0
    %285 = vmatprep.subr.bf16.mxu0 0
    %286 = vmatpush1.bf16.msra.mxu0 0
    %287 = vmatprep.subr.bf16.mxu0 0
    %288 = vmatpush1.bf16.msra.mxu0 0
    %289 = vmatprep.subr.bf16.mxu0 0
    %290 = vmatpush1.bf16.msra.mxu0 0
    %291 = vmatprep.subr.bf16.mxu0 0
    %292 = vmatpush1.bf16.msra.mxu0 0
    %293 = vmatprep.subr.bf16.mxu0 0
    %294 = vmatpush1.bf16.msra.mxu0 0
    %295 = vmatprep.mubr.bf16.mxu0 0
    %296 = vmatmul.mubr.bf16.gmra.mrb[0].mxu0 %v154
    %v297 = vpop.f32.mrb[0].mxu0
    %v298 = vadd.f32 0.0, %v297
    %v299 = vpop.f32.mrb[0].mxu0
    %v300 = vadd.f32 0.0, %v299
    %v301 = vpop.f32.mrb[0].mxu0
    %v302 = vpop.f32.mrb[0].mxu0
    %303 = vdwg.mxu0
    %304 = vmatprep.subr.bf16.mxu0 %v179
    %305 = vmatpush1.bf16.msra.mxu0 %v176
    %306 = vmatprep.subr.bf16.mxu0 0
    %307 = vmatpush1.bf16.msra.mxu0 0
    %308 = vmatprep.subr.bf16.mxu0 0
    %309 = vmatpush1.bf16.msra.mxu0 0
    %310 = vmatprep.subr.bf16.mxu0 0
    %311 = vmatpush1.bf16.msra.mxu0 0
    %312 = vmatprep.subr.bf16.mxu0 0
    %313 = vmatpush1.bf16.msra.mxu0 0
    %314 = vmatprep.subr.bf16.mxu0 0
    %315 = vmatpush1.bf16.msra.mxu0 0
    %316 = vmatprep.subr.bf16.mxu0 0
    %317 = vmatpush1.bf16.msra.mxu0 0
    %318 = vmatprep.subr.bf16.mxu0 0
    %319 = vmatpush1.bf16.msra.mxu0 0
    %320 = vmatprep.subr.bf16.mxu0 0
    %321 = vmatpush1.bf16.msra.mxu0 0
    %322 = vmatprep.subr.bf16.mxu0 0
    %323 = vmatpush1.bf16.msra.mxu0 0
    %324 = vmatprep.subr.bf16.mxu0 0
    %325 = vmatpush1.bf16.msra.mxu0 0
    %326 = vmatprep.subr.bf16.mxu0 0
    %327 = vmatpush1.bf16.msra.mxu0 0
    %328 = vmatprep.subr.bf16.mxu0 0
    %329 = vmatpush1.bf16.msra.mxu0 0
    %330 = vmatprep.subr.bf16.mxu0 0
    %331 = vmatpush1.bf16.msra.mxu0 0
    %332 = vmatprep.subr.bf16.mxu0 0
    %333 = vmatpush1.bf16.msra.mxu0 0
    %334 = vmatprep.subr.bf16.mxu0 0
    %335 = vmatpush1.bf16.msra.mxu0 0
    %336 = vmatprep.mubr.bf16.mxu0 0
    %337 = vmatmul.mubr.bf16.gmra.mrb[0].mxu0 %v154
    %v338 = vpop.f32.mrb[0].mxu0
    %v339 = vadd.f32 0.0, %v338
    %v340 = vpop.f32.mrb[0].mxu0
    %v341 = vadd.f32 0.0, %v340
    %v342 = vpop.f32.mrb[0].mxu0
    %v343 = vpop.f32.mrb[0].mxu0
    %344 = vdwg.mxu0
    %v353 = vunpack.c.l.b16 %v120
    %v354 = vunpack.c.h.b16 %v120
    %v355 = vunpack.c.l.b16 %v121
    %v356 = vunpack.c.h.b16 %v121
    %v357 = vunpack.c.l.b16 %v122
    %v358 = vunpack.c.h.b16 %v122
    %v359 = vunpack.c.l.b16 %v123
    %v360 = vunpack.c.h.b16 %v123
    %v361 = vunpack.c.l.b16 %v124
    %v362 = vunpack.c.h.b16 %v124
    %v363 = vunpack.c.l.b16 %v125
    %v364 = vunpack.c.h.b16 %v125
    %v365 = vunpack.c.l.b16 %v126
    %v366 = vunpack.c.h.b16 %v126
    %v367 = vunpack.c.l.b16 %v127
    %v368 = vunpack.c.h.b16 %v127
    %v369 = vpack.c.b16 %v361, %v353
    %v370 = vpack.c.b16 %v362, %v354
    %v371 = vpack.c.b16 %v363, %v355
    %v372 = vpack.c.b16 %v364, %v356
    %v373 = vpack.c.b16 %v365, %v357
    %v374 = vpack.c.b16 %v366, %v358
    %v375 = vpack.c.b16 %v367, %v359
    %v376 = vpack.c.b16 %v368, %v360
    %vm385 = vcmask 130048
    %v387 = vsel %vm385, %v117, 0
    %389 = vmatprep.subr.bf16.mxu0 %v370
    %390 = vmatpush1.bf16.msra.mxu0 %v369
    %391 = vmatprep.subr.bf16.mxu0 0
    %392 = vmatpush1.bf16.msra.mxu0 0
    %393 = vmatprep.subr.bf16.mxu0 0
    %394 = vmatpush1.bf16.msra.mxu0 0
    %395 = vmatprep.subr.bf16.mxu0 0
    %396 = vmatpush1.bf16.msra.mxu0 0
    %397 = vmatprep.subr.bf16.mxu0 0
    %398 = vmatpush1.bf16.msra.mxu0 0
    %399 = vmatprep.subr.bf16.mxu0 0
    %400 = vmatpush1.bf16.msra.mxu0 0
    %401 = vmatprep.subr.bf16.mxu0 0
    %402 = vmatpush1.bf16.msra.mxu0 0
    %403 = vmatprep.subr.bf16.mxu0 0
    %404 = vmatpush1.bf16.msra.mxu0 0
    %405 = vmatprep.subr.bf16.mxu0 0
    %406 = vmatpush1.bf16.msra.mxu0 0
    %407 = vmatprep.subr.bf16.mxu0 0
    %408 = vmatpush1.bf16.msra.mxu0 0
    %409 = vmatprep.subr.bf16.mxu0 0
    %410 = vmatpush1.bf16.msra.mxu0 0
    %411 = vmatprep.subr.bf16.mxu0 0
    %412 = vmatpush1.bf16.msra.mxu0 0
    %413 = vmatprep.subr.bf16.mxu0 0
    %414 = vmatpush1.bf16.msra.mxu0 0
    %415 = vmatprep.subr.bf16.mxu0 0
    %416 = vmatpush1.bf16.msra.mxu0 0
    %417 = vmatprep.subr.bf16.mxu0 0
    %418 = vmatpush1.bf16.msra.mxu0 0
    %419 = vmatprep.subr.bf16.mxu0 0
    %420 = vmatpush1.bf16.msra.mxu0 0
    %421 = vmatprep.mubr.bf16.mxu0 0
    %422 = vmatmul.mubr.bf16.gmra.mrb[0].mxu0 %v387
    %v423 = vpop.f32.mrb[0].mxu0
    %v424 = vadd.f32 %v216, %v423
    %v425 = vpop.f32.mrb[0].mxu0
    %v426 = vadd.f32 %v218, %v425
    %v427 = vpop.f32.mrb[0].mxu0
    %v428 = vpop.f32.mrb[0].mxu0
    %429 = vdwg.mxu0
    %430 = vmatprep.subr.bf16.mxu0 %v372
    %431 = vmatpush1.bf16.msra.mxu0 %v371
    %432 = vmatprep.subr.bf16.mxu0 0
    %433 = vmatpush1.bf16.msra.mxu0 0
    %434 = vmatprep.subr.bf16.mxu0 0
    %435 = vmatpush1.bf16.msra.mxu0 0
    %436 = vmatprep.subr.bf16.mxu0 0
    %437 = vmatpush1.bf16.msra.mxu0 0
    %438 = vmatprep.subr.bf16.mxu0 0
    %439 = vmatpush1.bf16.msra.mxu0 0
    %440 = vmatprep.subr.bf16.mxu0 0
    %441 = vmatpush1.bf16.msra.mxu0 0
    %442 = vmatprep.subr.bf16.mxu0 0
    %443 = vmatpush1.bf16.msra.mxu0 0
    %444 = vmatprep.subr.bf16.mxu0 0
    %445 = vmatpush1.bf16.msra.mxu0 0
    %446 = vmatprep.subr.bf16.mxu0 0
    %447 = vmatpush1.bf16.msra.mxu0 0
    %448 = vmatprep.subr.bf16.mxu0 0
    %449 = vmatpush1.bf16.msra.mxu0 0
    %450 = vmatprep.subr.bf16.mxu0 0
    %451 = vmatpush1.bf16.msra.mxu0 0
    %452 = vmatprep.subr.bf16.mxu0 0
    %453 = vmatpush1.bf16.msra.mxu0 0
    %454 = vmatprep.subr.bf16.mxu0 0
    %455 = vmatpush1.bf16.msra.mxu0 0
    %456 = vmatprep.subr.bf16.mxu0 0
    %457 = vmatpush1.bf16.msra.mxu0 0
    %458 = vmatprep.subr.bf16.mxu0 0
    %459 = vmatpush1.bf16.msra.mxu0 0
    %460 = vmatprep.subr.bf16.mxu0 0
    %461 = vmatpush1.bf16.msra.mxu0 0
    %462 = vmatprep.mubr.bf16.mxu0 0
    %463 = vmatmul.mubr.bf16.gmra.mrb[0].mxu0 %v387
    %v464 = vpop.f32.mrb[0].mxu0
    %v465 = vadd.f32 %v257, %v464
    %v466 = vpop.f32.mrb[0].mxu0
    %v467 = vadd.f32 %v259, %v466
    %v468 = vpop.f32.mrb[0].mxu0
    %v469 = vpop.f32.mrb[0].mxu0
    %470 = vdwg.mxu0
    %471 = vmatprep.subr.bf16.mxu0 %v374
    %472 = vmatpush1.bf16.msra.mxu0 %v373
    %473 = vmatprep.subr.bf16.mxu0 0
    %474 = vmatpush1.bf16.msra.mxu0 0
    %475 = vmatprep.subr.bf16.mxu0 0
    %476 = vmatpush1.bf16.msra.mxu0 0
    %477 = vmatprep.subr.bf16.mxu0 0
    %478 = vmatpush1.bf16.msra.mxu0 0
    %479 = vmatprep.subr.bf16.mxu0 0
    %480 = vmatpush1.bf16.msra.mxu0 0
    %481 = vmatprep.subr.bf16.mxu0 0
    %482 = vmatpush1.bf16.msra.mxu0 0
    %483 = vmatprep.subr.bf16.mxu0 0
    %484 = vmatpush1.bf16.msra.mxu0 0
    %485 = vmatprep.subr.bf16.mxu0 0
    %486 = vmatpush1.bf16.msra.mxu0 0
    %487 = vmatprep.subr.bf16.mxu0 0
    %488 = vmatpush1.bf16.msra.mxu0 0
    %489 = vmatprep.subr.bf16.mxu0 0
    %490 = vmatpush1.bf16.msra.mxu0 0
    %491 = vmatprep.subr.bf16.mxu0 0
    %492 = vmatpush1.bf16.msra.mxu0 0
    %493 = vmatprep.subr.bf16.mxu0 0
    %494 = vmatpush1.bf16.msra.mxu0 0
    %495 = vmatprep.subr.bf16.mxu0 0
    %496 = vmatpush1.bf16.msra.mxu0 0
    %497 = vmatprep.subr.bf16.mxu0 0
    %498 = vmatpush1.bf16.msra.mxu0 0
    %499 = vmatprep.subr.bf16.mxu0 0
    %500 = vmatpush1.bf16.msra.mxu0 0
    %501 = vmatprep.subr.bf16.mxu0 0
    %502 = vmatpush1.bf16.msra.mxu0 0
    %503 = vmatprep.mubr.bf16.mxu0 0
    %504 = vmatmul.mubr.bf16.gmra.mrb[0].mxu0 %v387
    %v505 = vpop.f32.mrb[0].mxu0
    %v506 = vadd.f32 %v298, %v505
    %v507 = vpop.f32.mrb[0].mxu0
    %v508 = vadd.f32 %v300, %v507
    %v509 = vpop.f32.mrb[0].mxu0
    %v510 = vpop.f32.mrb[0].mxu0
    %511 = vdwg.mxu0
    %512 = vmatprep.subr.bf16.mxu0 %v376
    %513 = vmatpush1.bf16.msra.mxu0 %v375
    %514 = vmatprep.subr.bf16.mxu0 0
    %515 = vmatpush1.bf16.msra.mxu0 0
    %516 = vmatprep.subr.bf16.mxu0 0
    %517 = vmatpush1.bf16.msra.mxu0 0
    %518 = vmatprep.subr.bf16.mxu0 0
    %519 = vmatpush1.bf16.msra.mxu0 0
    %520 = vmatprep.subr.bf16.mxu0 0
    %521 = vmatpush1.bf16.msra.mxu0 0
    %522 = vmatprep.subr.bf16.mxu0 0
    %523 = vmatpush1.bf16.msra.mxu0 0
    %524 = vmatprep.subr.bf16.mxu0 0
    %525 = vmatpush1.bf16.msra.mxu0 0
    %526 = vmatprep.subr.bf16.mxu0 0
    %527 = vmatpush1.bf16.msra.mxu0 0
    %528 = vmatprep.subr.bf16.mxu0 0
    %529 = vmatpush1.bf16.msra.mxu0 0
    %530 = vmatprep.subr.bf16.mxu0 0
    %531 = vmatpush1.bf16.msra.mxu0 0
    %532 = vmatprep.subr.bf16.mxu0 0
    %533 = vmatpush1.bf16.msra.mxu0 0
    %534 = vmatprep.subr.bf16.mxu0 0
    %535 = vmatpush1.bf16.msra.mxu0 0
    %536 = vmatprep.subr.bf16.mxu0 0
    %537 = vmatpush1.bf16.msra.mxu0 0
    %538 = vmatprep.subr.bf16.mxu0 0
    %539 = vmatpush1.bf16.msra.mxu0 0
    %540 = vmatprep.subr.bf16.mxu0 0
    %541 = vmatpush1.bf16.msra.mxu0 0
    %542 = vmatprep.subr.bf16.mxu0 0
    %543 = vmatpush1.bf16.msra.mxu0 0
    %544 = vmatprep.mubr.bf16.mxu0 0
    %545 = vmatmul.mubr.bf16.gmra.mrb[0].mxu0 %v387
    %v546 = vpop.f32.mrb[0].mxu0
    %v547 = vadd.f32 %v339, %v546
    %v548 = vpop.f32.mrb[0].mxu0
    %v549 = vadd.f32 %v341, %v548
    %v550 = vpop.f32.mrb[0].mxu0
    %v551 = vpop.f32.mrb[0].mxu0
    %552 = vdwg.mxu0
    %v553 = vld [vmem:[%s4] sm:$0xff]
    %v555 = vlaneseq
    %v556 = vshrl.u32 %v555, 7
    %v557 = vsub.s32 0, %v556
    %v558 = vrot.slane %v553, %v557
    %v559 = vlaneseq
    %v560 = vshrl.u32 %v559, 7
    %v561 = vsub.s32 1, %v560
    %v562 = vrot.slane %v553, %v561
    %v563 = vlaneseq
    %v564 = vshrl.u32 %v563, 7
    %v565 = vsub.s32 2, %v564
    %v566 = vrot.slane %v553, %v565
    %v567 = vlaneseq
    %v568 = vshrl.u32 %v567, 7
    %v569 = vsub.s32 3, %v568
    %v570 = vrot.slane %v553, %v569
    %v571 = vlaneseq
    %v572 = vshrl.u32 %v571, 7
    %v573 = vsub.s32 4, %v572
    %v574 = vrot.slane %v553, %v573
    %v575 = vlaneseq
    %v576 = vshrl.u32 %v575, 7
    %v577 = vsub.s32 5, %v576
    %v578 = vrot.slane %v553, %v577
    %v579 = vlaneseq
    %v580 = vshrl.u32 %v579, 7
    %v581 = vsub.s32 6, %v580
    %v582 = vrot.slane %v553, %v581
    %v583 = vlaneseq
    %v584 = vshrl.u32 %v583, 7
    %v585 = vsub.s32 7, %v584
    %v586 = vrot.slane %v553, %v585
    %v595 = vadd.f32 %v424, %v558
    %v596 = vadd.f32 %v426, %v562
    %v597 = vadd.f32 %v465, %v566
    %v598 = vadd.f32 %v467, %v570
    %v599 = vadd.f32 %v506, %v574
    %v600 = vadd.f32 %v508, %v578
    %v601 = vadd.f32 %v547, %v582
    %v602 = vadd.f32 %v549, %v586
    %v603 = vmax.f32 %v595, 0.0
    %v604 = vmax.f32 %v596, 0.0
    %v605 = vmax.f32 %v597, 0.0
    %v606 = vmax.f32 %v598, 0.0
    %v607 = vmax.f32 %v599, 0.0
    %v608 = vmax.f32 %v600, 0.0
    %v609 = vmax.f32 %v601, 0.0
    %v610 = vmax.f32 %v602, 0.0
    %v611 = vpack.c.bf16 %v603, %v603
    %v612 = vpack.c.bf16 %v604, %v604
    %v613 = vpack.c.bf16 %v605, %v605
    %v614 = vpack.c.bf16 %v606, %v606
    %v615 = vpack.c.bf16 %v607, %v607
    %v616 = vpack.c.bf16 %v608, %v608
    %v617 = vpack.c.bf16 %v609, %v609
    %v618 = vpack.c.bf16 %v610, %v610
    %v619 = vld [vmem:[#allocation10] sm:$0xff]
    %v620 = vld [vmem:[#allocation10 + $0x8] sm:$0xf]
    %v621 = vld [vmem:[#allocation10 + $0xc] sm:$0xff]
    %v622 = vld [vmem:[#allocation10 + $0x14] sm:$0xf]
    %v623 = vld [vmem:[#allocation10 + $0x18] sm:$0xff]
    %v624 = vld [vmem:[#allocation10 + $0x20] sm:$0xf]
    %v625 = vld [vmem:[#allocation10 + $0x24] sm:$0xff]
    %v626 = vld [vmem:[#allocation10 + $0x2c] sm:$0xf]
    %v627 = vld [vmem:[#allocation10 + $0x30] sm:$0xff]
    %v628 = vld [vmem:[#allocation10 + $0x38] sm:$0xf]
    %v629 = vld [vmem:[#allocation10 + $0x3c] sm:$0xff]
    %v630 = vld [vmem:[#allocation10 + $0x44] sm:$0xf]
    %v631 = vld [vmem:[#allocation10 + $0x48] sm:$0xff]
    %v632 = vld [vmem:[#allocation10 + $0x50] sm:$0xf]
    %v633 = vld [vmem:[#allocation10 + $0x54] sm:$0xff]
    %v634 = vld [vmem:[#allocation10 + $0x5c] sm:$0xf]
    %v635 = vld [vmem:[#allocation10 + $0x60] sm:$0xff]
    %v636 = vld [vmem:[#allocation10 + $0x68] sm:$0xf]
    %v637 = vld [vmem:[#allocation10 + $0x6c] sm:$0xff]
    %v638 = vld [vmem:[#allocation10 + $0x74] sm:$0xf]
    %v639 = vld [vmem:[#allocation10 + $0x78] sm:$0xff]
    %v640 = vld [vmem:[#allocation10 + $0x80] sm:$0xf]
    %v641 = vld [vmem:[#allocation10 + $0x84] sm:$0xff]
    %v642 = vld [vmem:[#allocation10 + $0x8c] sm:$0xf]
    %v643 = vld [vmem:[#allocation10 + $0x90] sm:$0xff]
    %v644 = vld [vmem:[#allocation10 + $0x98] sm:$0xf]
    %v645 = vld [vmem:[#allocation10 + $0x9c] sm:$0xff]
    %v646 = vld [vmem:[#allocation10 + $0xa4] sm:$0xf]
    %v647 = vld [vmem:[#allocation10 + $0xa8] sm:$0xff]
    %v648 = vld [vmem:[#allocation10 + $0xb0] sm:$0xf]
    %v649 = vld [vmem:[#allocation10 + $0xb4] sm:$0xff]
    %v650 = vld [vmem:[#allocation10 + $0xbc] sm:$0xf]
    %v651 = vld [vmem:[#allocation10 + $0xc0] sm:$0xff]
    %v652 = vld [vmem:[#allocation10 + $0xc8] sm:$0xf]
    %v653 = vld [vmem:[#allocation10 + $0xcc] sm:$0xff]
    %v654 = vld [vmem:[#allocation10 + $0xd4] sm:$0xf]
    %v655 = vld [vmem:[#allocation10 + $0xd8] sm:$0xff]
    %v656 = vld [vmem:[#allocation10 + $0xe0] sm:$0xf]
    %v657 = vld [vmem:[#allocation10 + $0xe4] sm:$0xff]
    %v658 = vld [vmem:[#allocation10 + $0xec] sm:$0xf]
    %v659 = vld [vmem:[#allocation10 + $0xf0] sm:$0xff]
    %v660 = vld [vmem:[#allocation10 + $0xf8] sm:$0xf]
    %v661 = vld [vmem:[#allocation10 + $0xfc] sm:$0xff]
    %v662 = vld [vmem:[#allocation10 + $0x104] sm:$0xf]
    %v663 = vld [vmem:[#allocation10 + $0x108] sm:$0xff]
    %v664 = vld [vmem:[#allocation10 + $0x110] sm:$0xf]
    %v665 = vld [vmem:[#allocation10 + $0x114] sm:$0xff]
    %v666 = vld [vmem:[#allocation10 + $0x11c] sm:$0xf]
    %v667 = vld [vmem:[#allocation10 + $0x120] sm:$0xff]
    %v668 = vld [vmem:[#allocation10 + $0x128] sm:$0xf]
    %v669 = vld [vmem:[#allocation10 + $0x12c] sm:$0xff]
    %v670 = vld [vmem:[#allocation10 + $0x134] sm:$0xf]
    %v671 = vld [vmem:[#allocation10 + $0x138] sm:$0xff]
    %v672 = vld [vmem:[#allocation10 + $0x140] sm:$0xf]
    %v673 = vld [vmem:[#allocation10 + $0x144] sm:$0xff]
    %v674 = vld [vmem:[#allocation10 + $0x14c] sm:$0xf]
    %v675 = vld [vmem:[#allocation10 + $0x150] sm:$0xff]
    %v676 = vld [vmem:[#allocation10 + $0x158] sm:$0xf]
    %v677 = vld [vmem:[#allocation10 + $0x15c] sm:$0xff]
    %v678 = vld [vmem:[#allocation10 + $0x164] sm:$0xf]
    %v679 = vld [vmem:[#allocation10 + $0x168] sm:$0xff]
    %v680 = vld [vmem:[#allocation10 + $0x170] sm:$0xf]
    %v681 = vld [vmem:[#allocation10 + $0x174] sm:$0xff]
    %v682 = vld [vmem:[#allocation10 + $0x17c] sm:$0xf]
    %v683 = vld [vmem:[#allocation10 + $0x180] sm:$0xff]
    %v684 = vld [vmem:[#allocation10 + $0x188] sm:$0xf]
    %v685 = vld [vmem:[#allocation10 + $0x18c] sm:$0xff]
    %v686 = vld [vmem:[#allocation10 + $0x194] sm:$0xf]
    %v687 = vld [vmem:[#allocation10 + $0x198] sm:$0xff]
    %v688 = vld [vmem:[#allocation10 + $0x1a0] sm:$0xf]
    %v689 = vld [vmem:[#allocation10 + $0x1a4] sm:$0xff]
    %v690 = vld [vmem:[#allocation10 + $0x1ac] sm:$0xf]
    %v691 = vld [vmem:[#allocation10 + $0x1b0] sm:$0xff]
    %v692 = vld [vmem:[#allocation10 + $0x1b8] sm:$0xf]
    %v693 = vld [vmem:[#allocation10 + $0x1bc] sm:$0xff]
    %v694 = vld [vmem:[#allocation10 + $0x1c4] sm:$0xf]
    %v695 = vld [vmem:[#allocation10 + $0x1c8] sm:$0xff]
    %v696 = vld [vmem:[#allocation10 + $0x1d0] sm:$0xf]
    %v697 = vld [vmem:[#allocation10 + $0x1d4] sm:$0xff]
    %v698 = vld [vmem:[#allocation10 + $0x1dc] sm:$0xf]
    %v699 = vld [vmem:[#allocation10 + $0x1e0] sm:$0xff]
    %v700 = vld [vmem:[#allocation10 + $0x1e8] sm:$0xf]
    %v701 = vld [vmem:[#allocation10 + $0x1ec] sm:$0xff]
    %v702 = vld [vmem:[#allocation10 + $0x1f4] sm:$0xf]
    %v703 = vld [vmem:[#allocation10 + $0x1f8] sm:$0xff]
    %v704 = vld [vmem:[#allocation10 + $0x200] sm:$0xf]
    %v705 = vld [vmem:[#allocation10 + $0x204] sm:$0xff]
    %v706 = vld [vmem:[#allocation10 + $0x20c] sm:$0xf]
    %v707 = vld [vmem:[#allocation10 + $0x210] sm:$0xff]
    %v708 = vld [vmem:[#allocation10 + $0x218] sm:$0xf]
    %v709 = vld [vmem:[#allocation10 + $0x21c] sm:$0xff]
    %v710 = vld [vmem:[#allocation10 + $0x224] sm:$0xf]
    %v711 = vld [vmem:[#allocation10 + $0x228] sm:$0xff]
    %v712 = vld [vmem:[#allocation10 + $0x230] sm:$0xf]
    %v713 = vld [vmem:[#allocation10 + $0x234] sm:$0xff]
    %v714 = vld [vmem:[#allocation10 + $0x23c] sm:$0xf]
    %v715 = vld [vmem:[#allocation10 + $0x240] sm:$0xff]
    %v716 = vld [vmem:[#allocation10 + $0x248] sm:$0xf]
    %v717 = vld [vmem:[#allocation10 + $0x24c] sm:$0xff]
    %v718 = vld [vmem:[#allocation10 + $0x254] sm:$0xf]
    %v719 = vld [vmem:[#allocation10 + $0x258] sm:$0xff]
    %v720 = vld [vmem:[#allocation10 + $0x260] sm:$0xf]
    %v721 = vld [vmem:[#allocation10 + $0x264] sm:$0xff]
    %v722 = vld [vmem:[#allocation10 + $0x26c] sm:$0xf]
    %v723 = vld [vmem:[#allocation10 + $0x270] sm:$0xff]
    %v724 = vld [vmem:[#allocation10 + $0x278] sm:$0xf]
    %v725 = vld [vmem:[#allocation10 + $0x27c] sm:$0xff]
    %v726 = vld [vmem:[#allocation10 + $0x284] sm:$0xf]
    %v727 = vld [vmem:[#allocation10 + $0x288] sm:$0xff]
    %v728 = vld [vmem:[#allocation10 + $0x290] sm:$0xf]
    %v729 = vld [vmem:[#allocation10 + $0x294] sm:$0xff]
    %v730 = vld [vmem:[#allocation10 + $0x29c] sm:$0xf]
    %v731 = vld [vmem:[#allocation10 + $0x2a0] sm:$0xff]
    %v732 = vld [vmem:[#allocation10 + $0x2a8] sm:$0xf]
    %v733 = vld [vmem:[#allocation10 + $0x2ac] sm:$0xff]
    %v734 = vld [vmem:[#allocation10 + $0x2b4] sm:$0xf]
    %v735 = vld [vmem:[#allocation10 + $0x2b8] sm:$0xff]
    %v736 = vld [vmem:[#allocation10 + $0x2c0] sm:$0xf]
    %v737 = vld [vmem:[#allocation10 + $0x2c4] sm:$0xff]
    %v738 = vld [vmem:[#allocation10 + $0x2cc] sm:$0xf]
    %v739 = vld [vmem:[#allocation10 + $0x2d0] sm:$0xff]
    %v740 = vld [vmem:[#allocation10 + $0x2d8] sm:$0xf]
    %v741 = vld [vmem:[#allocation10 + $0x2dc] sm:$0xff]
    %v742 = vld [vmem:[#allocation10 + $0x2e4] sm:$0xf]
    %v743 = vld [vmem:[#allocation10 + $0x2e8] sm:$0xff]
    %v744 = vld [vmem:[#allocation10 + $0x2f0] sm:$0xf]
    %v745 = vld [vmem:[#allocation10 + $0x2f4] sm:$0xff]
    %v746 = vld [vmem:[#allocation10 + $0x2fc] sm:$0xf]
    %v747 = vld [vmem:[%s6] sm:$0x7]
    %v749 = vlaneseq
    %v750 = vshrl.u32 %v749, 7
    %v751 = vsub.s32 0, %v750
    %v752 = vrot.slane %v747, %v751
    %v753 = vlaneseq
    %v754 = vshrl.u32 %v753, 7
    %v755 = vsub.s32 1, %v754
    %v756 = vrot.slane %v747, %v755
    %v757 = vlaneseq
    %v758 = vshrl.u32 %v757, 7
    %v759 = vsub.s32 2, %v758
    %v760 = vrot.slane %v747, %v759
    %v892 = vunpack.c.l.b16 %v619
    %v893 = vunpack.c.h.b16 %v619
    %v894 = vunpack.c.l.b16 %v620
    %v895 = vunpack.c.l.b16 %v621
    %v896 = vunpack.c.h.b16 %v621
    %v897 = vunpack.c.l.b16 %v622
    %v898 = vunpack.c.l.b16 %v623
    %v899 = vunpack.c.h.b16 %v623
    %v900 = vunpack.c.l.b16 %v624
    %v901 = vunpack.c.l.b16 %v625
    %v902 = vunpack.c.h.b16 %v625
    %v903 = vunpack.c.l.b16 %v626
    %v904 = vunpack.c.l.b16 %v627
    %v905 = vunpack.c.h.b16 %v627
    %v906 = vunpack.c.l.b16 %v628
    %v907 = vunpack.c.l.b16 %v629
    %v908 = vunpack.c.h.b16 %v629
    %v909 = vunpack.c.l.b16 %v630
    %v910 = vunpack.c.l.b16 %v631
    %v911 = vunpack.c.h.b16 %v631
    %v912 = vunpack.c.l.b16 %v632
    %v913 = vunpack.c.l.b16 %v633
    %v914 = vunpack.c.h.b16 %v633
    %v915 = vunpack.c.l.b16 %v634
    %v916 = vunpack.c.l.b16 %v635
    %v917 = vunpack.c.h.b16 %v635
    %v918 = vunpack.c.l.b16 %v636
    %v919 = vunpack.c.l.b16 %v637
    %v920 = vunpack.c.h.b16 %v637
    %v921 = vunpack.c.l.b16 %v638
    %v922 = vunpack.c.l.b16 %v639
    %v923 = vunpack.c.h.b16 %v639
    %v924 = vunpack.c.l.b16 %v640
    %v925 = vunpack.c.l.b16 %v641
    %v926 = vunpack.c.h.b16 %v641
    %v927 = vunpack.c.l.b16 %v642
    %v928 = vunpack.c.l.b16 %v643
    %v929 = vunpack.c.h.b16 %v643
    %v930 = vunpack.c.l.b16 %v644
    %v931 = vunpack.c.l.b16 %v645
    %v932 = vunpack.c.h.b16 %v645
    %v933 = vunpack.c.l.b16 %v646
    %v934 = vunpack.c.l.b16 %v647
    %v935 = vunpack.c.h.b16 %v647
    %v936 = vunpack.c.l.b16 %v648
    %v937 = vunpack.c.l.b16 %v649
    %v938 = vunpack.c.h.b16 %v649
    %v939 = vunpack.c.l.b16 %v650
    %v940 = vunpack.c.l.b16 %v651
    %v941 = vunpack.c.h.b16 %v651
    %v942 = vunpack.c.l.b16 %v652
    %v943 = vunpack.c.l.b16 %v653
    %v944 = vunpack.c.h.b16 %v653
    %v945 = vunpack.c.l.b16 %v654
    %v946 = vunpack.c.l.b16 %v655
    %v947 = vunpack.c.h.b16 %v655
    %v948 = vunpack.c.l.b16 %v656
    %v949 = vunpack.c.l.b16 %v657
    %v950 = vunpack.c.h.b16 %v657
    %v951 = vunpack.c.l.b16 %v658
    %v952 = vunpack.c.l.b16 %v659
    %v953 = vunpack.c.h.b16 %v659
    %v954 = vunpack.c.l.b16 %v660
    %v955 = vunpack.c.l.b16 %v661
    %v956 = vunpack.c.h.b16 %v661
    %v957 = vunpack.c.l.b16 %v662
    %v958 = vunpack.c.l.b16 %v663
    %v959 = vunpack.c.h.b16 %v663
    %v960 = vunpack.c.l.b16 %v664
    %v961 = vunpack.c.l.b16 %v665
    %v962 = vunpack.c.h.b16 %v665
    %v963 = vunpack.c.l.b16 %v666
    %v964 = vunpack.c.l.b16 %v667
    %v965 = vunpack.c.h.b16 %v667
    %v966 = vunpack.c.l.b16 %v668
    %v967 = vunpack.c.l.b16 %v669
    %v968 = vunpack.c.h.b16 %v669
    %v969 = vunpack.c.l.b16 %v670
    %v970 = vunpack.c.l.b16 %v671
    %v971 = vunpack.c.h.b16 %v671
    %v972 = vunpack.c.l.b16 %v672
    %v973 = vunpack.c.l.b16 %v673
    %v974 = vunpack.c.h.b16 %v673
    %v975 = vunpack.c.l.b16 %v674
    %v976 = vunpack.c.l.b16 %v675
    %v977 = vunpack.c.h.b16 %v675
    %v978 = vunpack.c.l.b16 %v676
    %v979 = vunpack.c.l.b16 %v677
    %v980 = vunpack.c.h.b16 %v677
    %v981 = vunpack.c.l.b16 %v678
    %v982 = vunpack.c.l.b16 %v679
    %v983 = vunpack.c.h.b16 %v679
    %v984 = vunpack.c.l.b16 %v680
    %v985 = vunpack.c.l.b16 %v681
    %v986 = vunpack.c.h.b16 %v681
    %v987 = vunpack.c.l.b16 %v682
    %v988 = vunpack.c.l.b16 %v683
    %v989 = vunpack.c.h.b16 %v683
    %v990 = vunpack.c.l.b16 %v684
    %v991 = vunpack.c.l.b16 %v685
    %v992 = vunpack.c.h.b16 %v685
    %v993 = vunpack.c.l.b16 %v686
    %v994 = vunpack.c.l.b16 %v687
    %v995 = vunpack.c.h.b16 %v687
    %v996 = vunpack.c.l.b16 %v688
    %v997 = vunpack.c.l.b16 %v689
    %v998 = vunpack.c.h.b16 %v689
    %v999 = vunpack.c.l.b16 %v690
    %v1000 = vunpack.c.l.b16 %v691
    %v1001 = vunpack.c.h.b16 %v691
    %v1002 = vunpack.c.l.b16 %v692
    %v1003 = vunpack.c.l.b16 %v693
    %v1004 = vunpack.c.h.b16 %v693
    %v1005 = vunpack.c.l.b16 %v694
    %v1006 = vunpack.c.l.b16 %v695
    %v1007 = vunpack.c.h.b16 %v695
    %v1008 = vunpack.c.l.b16 %v696
    %v1009 = vunpack.c.l.b16 %v697
    %v1010 = vunpack.c.h.b16 %v697
    %v1011 = vunpack.c.l.b16 %v698
    %v1012 = vunpack.c.l.b16 %v699
    %v1013 = vunpack.c.h.b16 %v699
    %v1014 = vunpack.c.l.b16 %v700
    %v1015 = vunpack.c.l.b16 %v701
    %v1016 = vunpack.c.h.b16 %v701
    %v1017 = vunpack.c.l.b16 %v702
    %v1018 = vunpack.c.l.b16 %v703
    %v1019 = vunpack.c.h.b16 %v703
    %v1020 = vunpack.c.l.b16 %v704
    %v1021 = vunpack.c.l.b16 %v705
    %v1022 = vunpack.c.h.b16 %v705
    %v1023 = vunpack.c.l.b16 %v706
    %v1024 = vunpack.c.l.b16 %v707
    %v1025 = vunpack.c.h.b16 %v707
    %v1026 = vunpack.c.l.b16 %v708
    %v1027 = vunpack.c.l.b16 %v709
    %v1028 = vunpack.c.h.b16 %v709
    %v1029 = vunpack.c.l.b16 %v710
    %v1030 = vunpack.c.l.b16 %v711
    %v1031 = vunpack.c.h.b16 %v711
    %v1032 = vunpack.c.l.b16 %v712
    %v1033 = vunpack.c.l.b16 %v713
    %v1034 = vunpack.c.h.b16 %v713
    %v1035 = vunpack.c.l.b16 %v714
    %v1036 = vunpack.c.l.b16 %v715
    %v1037 = vunpack.c.h.b16 %v715
    %v1038 = vunpack.c.l.b16 %v716
    %v1039 = vunpack.c.l.b16 %v717
    %v1040 = vunpack.c.h.b16 %v717
    %v1041 = vunpack.c.l.b16 %v718
    %v1042 = vunpack.c.l.b16 %v719
    %v1043 = vunpack.c.h.b16 %v719
    %v1044 = vunpack.c.l.b16 %v720
    %v1045 = vunpack.c.l.b16 %v721
    %v1046 = vunpack.c.h.b16 %v721
    %v1047 = vunpack.c.l.b16 %v722
    %v1048 = vunpack.c.l.b16 %v723
    %v1049 = vunpack.c.h.b16 %v723
    %v1050 = vunpack.c.l.b16 %v724
    %v1051 = vunpack.c.l.b16 %v725
    %v1052 = vunpack.c.h.b16 %v725
    %v1053 = vunpack.c.l.b16 %v726
    %v1054 = vunpack.c.l.b16 %v727
    %v1055 = vunpack.c.h.b16 %v727
    %v1056 = vunpack.c.l.b16 %v728
    %v1057 = vunpack.c.l.b16 %v729
    %v1058 = vunpack.c.h.b16 %v729
    %v1059 = vunpack.c.l.b16 %v730
    %v1060 = vunpack.c.l.b16 %v731
    %v1061 = vunpack.c.h.b16 %v731
    %v1062 = vunpack.c.l.b16 %v732
    %v1063 = vunpack.c.l.b16 %v733
    %v1064 = vunpack.c.h.b16 %v733
    %v1065 = vunpack.c.l.b16 %v734
    %v1066 = vunpack.c.l.b16 %v735
    %v1067 = vunpack.c.h.b16 %v735
    %v1068 = vunpack.c.l.b16 %v736
    %v1069 = vunpack.c.l.b16 %v737
    %v1070 = vunpack.c.h.b16 %v737
    %v1071 = vunpack.c.l.b16 %v738
    %v1072 = vunpack.c.l.b16 %v739
    %v1073 = vunpack.c.h.b16 %v739
    %v1074 = vunpack.c.l.b16 %v740
    %v1075 = vunpack.c.l.b16 %v741
    %v1076 = vunpack.c.h.b16 %v741
    %v1077 = vunpack.c.l.b16 %v742
    %v1078 = vunpack.c.l.b16 %v743
    %v1079 = vunpack.c.h.b16 %v743
    %v1080 = vunpack.c.l.b16 %v744
    %v1081 = vunpack.c.l.b16 %v745
    %v1082 = vunpack.c.h.b16 %v745
    %v1083 = vunpack.c.l.b16 %v746
    %v1084 = vpack.c.b16 %v895, %v892
    %v1085 = vpack.c.b16 %v896, %v893
    %v1086 = vpack.c.b16 %v897, %v894
    %v1087 = vpack.c.b16 %v901, %v898
    %v1088 = vpack.c.b16 %v902, %v899
    %v1089 = vpack.c.b16 %v903, %v900
    %v1090 = vpack.c.b16 %v907, %v904
    %v1091 = vpack.c.b16 %v908, %v905
    %v1092 = vpack.c.b16 %v909, %v906
    %v1093 = vpack.c.b16 %v913, %v910
    %v1094 = vpack.c.b16 %v914, %v911
    %v1095 = vpack.c.b16 %v915, %v912
    %v1096 = vpack.c.b16 %v919, %v916
    %v1097 = vpack.c.b16 %v920, %v917
    %v1098 = vpack.c.b16 %v921, %v918
    %v1099 = vpack.c.b16 %v925, %v922
    %v1100 = vpack.c.b16 %v926, %v923
    %v1101 = vpack.c.b16 %v927, %v924
    %v1102 = vpack.c.b16 %v931, %v928
    %v1103 = vpack.c.b16 %v932, %v929
    %v1104 = vpack.c.b16 %v933, %v930
    %v1105 = vpack.c.b16 %v937, %v934
    %v1106 = vpack.c.b16 %v938, %v935
    %v1107 = vpack.c.b16 %v939, %v936
    %v1108 = vpack.c.b16 %v943, %v940
    %v1109 = vpack.c.b16 %v944, %v941
    %v1110 = vpack.c.b16 %v945, %v942
    %v1111 = vpack.c.b16 %v949, %v946
    %v1112 = vpack.c.b16 %v950, %v947
    %v1113 = vpack.c.b16 %v951, %v948
    %v1114 = vpack.c.b16 %v955, %v952
    %v1115 = vpack.c.b16 %v956, %v953
    %v1116 = vpack.c.b16 %v957, %v954
    %v1117 = vpack.c.b16 %v961, %v958
    %v1118 = vpack.c.b16 %v962, %v959
    %v1119 = vpack.c.b16 %v963, %v960
    %v1120 = vpack.c.b16 %v967, %v964
    %v1121 = vpack.c.b16 %v968, %v965
    %v1122 = vpack.c.b16 %v969, %v966
    %v1123 = vpack.c.b16 %v973, %v970
    %v1124 = vpack.c.b16 %v974, %v971
    %v1125 = vpack.c.b16 %v975, %v972
    %v1126 = vpack.c.b16 %v979, %v976
    %v1127 = vpack.c.b16 %v980, %v977
    %v1128 = vpack.c.b16 %v981, %v978
    %v1129 = vpack.c.b16 %v985, %v982
    %v1130 = vpack.c.b16 %v986, %v983
    %v1131 = vpack.c.b16 %v987, %v984
    %v1132 = vpack.c.b16 %v991, %v988
    %v1133 = vpack.c.b16 %v992, %v989
    %v1134 = vpack.c.b16 %v993, %v990
    %v1135 = vpack.c.b16 %v997, %v994
    %v1136 = vpack.c.b16 %v998, %v995
    %v1137 = vpack.c.b16 %v999, %v996
    %v1138 = vpack.c.b16 %v1003, %v1000
    %v1139 = vpack.c.b16 %v1004, %v1001
    %v1140 = vpack.c.b16 %v1005, %v1002
    %v1141 = vpack.c.b16 %v1009, %v1006
    %v1142 = vpack.c.b16 %v1010, %v1007
    %v1143 = vpack.c.b16 %v1011, %v1008
    %v1144 = vpack.c.b16 %v1015, %v1012
    %v1145 = vpack.c.b16 %v1016, %v1013
    %v1146 = vpack.c.b16 %v1017, %v1014
    %v1147 = vpack.c.b16 %v1021, %v1018
    %v1148 = vpack.c.b16 %v1022, %v1019
    %v1149 = vpack.c.b16 %v1023, %v1020
    %v1150 = vpack.c.b16 %v1027, %v1024
    %v1151 = vpack.c.b16 %v1028, %v1025
    %v1152 = vpack.c.b16 %v1029, %v1026
    %v1153 = vpack.c.b16 %v1033, %v1030
    %v1154 = vpack.c.b16 %v1034, %v1031
    %v1155 = vpack.c.b16 %v1035, %v1032
    %v1156 = vpack.c.b16 %v1039, %v1036
    %v1157 = vpack.c.b16 %v1040, %v1037
    %v1158 = vpack.c.b16 %v1041, %v1038
    %v1159 = vpack.c.b16 %v1045, %v1042
    %v1160 = vpack.c.b16 %v1046, %v1043
    %v1161 = vpack.c.b16 %v1047, %v1044
    %v1162 = vpack.c.b16 %v1051, %v1048
    %v1163 = vpack.c.b16 %v1052, %v1049
    %v1164 = vpack.c.b16 %v1053, %v1050
    %v1165 = vpack.c.b16 %v1057, %v1054
    %v1166 = vpack.c.b16 %v1058, %v1055
    %v1167 = vpack.c.b16 %v1059, %v1056
    %v1168 = vpack.c.b16 %v1063, %v1060
    %v1169 = vpack.c.b16 %v1064, %v1061
    %v1170 = vpack.c.b16 %v1065, %v1062
    %v1171 = vpack.c.b16 %v1069, %v1066
    %v1172 = vpack.c.b16 %v1070, %v1067
    %v1173 = vpack.c.b16 %v1071, %v1068
    %v1174 = vpack.c.b16 %v1075, %v1072
    %v1175 = vpack.c.b16 %v1076, %v1073
    %v1176 = vpack.c.b16 %v1077, %v1074
    %v1177 = vpack.c.b16 %v1081, %v1078
    %v1178 = vpack.c.b16 %v1082, %v1079
    %v1179 = vpack.c.b16 %v1083, %v1080
    %1276 = vmatprep.subr.bf16.mxu0 %v1085
    %1277 = vmatpush1.bf16.msra.mxu0 %v1084
    %1278 = vmatprep.subr.bf16.mxu0 %v1088
    %1279 = vmatpush1.bf16.msra.mxu0 %v1087
    %1280 = vmatprep.subr.bf16.mxu0 %v1091
    %1281 = vmatpush1.bf16.msra.mxu0 %v1090
    %1282 = vmatprep.subr.bf16.mxu0 %v1094
    %1283 = vmatpush1.bf16.msra.mxu0 %v1093
    %1284 = vmatprep.subr.bf16.mxu0 %v1097
    %1285 = vmatpush1.bf16.msra.mxu0 %v1096
    %1286 = vmatprep.subr.bf16.mxu0 %v1100
    %1287 = vmatpush1.bf16.msra.mxu0 %v1099
    %1288 = vmatprep.subr.bf16.mxu0 %v1103
    %1289 = vmatpush1.bf16.msra.mxu0 %v1102
    %1290 = vmatprep.subr.bf16.mxu0 %v1106
    %1291 = vmatpush1.bf16.msra.mxu0 %v1105
    %1292 = vmatprep.subr.bf16.mxu0 %v1109
    %1293 = vmatpush1.bf16.msra.mxu0 %v1108
    %1294 = vmatprep.subr.bf16.mxu0 %v1112
    %1295 = vmatpush1.bf16.msra.mxu0 %v1111
    %1296 = vmatprep.subr.bf16.mxu0 %v1115
    %1297 = vmatpush1.bf16.msra.mxu0 %v1114
    %1298 = vmatprep.subr.bf16.mxu0 %v1118
    %1299 = vmatpush1.bf16.msra.mxu0 %v1117
    %1300 = vmatprep.subr.bf16.mxu0 %v1121
    %1301 = vmatpush1.bf16.msra.mxu0 %v1120
    %1302 = vmatprep.subr.bf16.mxu0 %v1124
    %1303 = vmatpush1.bf16.msra.mxu0 %v1123
    %1304 = vmatprep.subr.bf16.mxu0 %v1127
    %1305 = vmatpush1.bf16.msra.mxu0 %v1126
    %1306 = vmatprep.subr.bf16.mxu0 %v1130
    %1307 = vmatpush1.bf16.msra.mxu0 %v1129
    %1308 = vmatprep.mubr.bf16.mxu0 %v612
    %1309 = vmatmul.mubr.bf16.gmra.mrb[0].mxu0 %v611
    %v1310 = vpop.f32.mrb[0].mxu0
    %v1311 = vadd.f32 %v752, %v1310
    %v1312 = vpop.f32.mrb[0].mxu0
    %v1313 = vadd.f32 %v756, %v1312
    %v1314 = vpop.f32.mrb[0].mxu0
    %v1315 = vpop.f32.mrb[0].mxu0
    %1316 = vdwg.mxu0
    %1317 = vmatprep.subr.bf16.mxu0 %v1133
    %1318 = vmatpush1.bf16.msra.mxu0 %v1132
    %1319 = vmatprep.subr.bf16.mxu0 %v1136
    %1320 = vmatpush1.bf16.msra.mxu0 %v1135
    %1321 = vmatprep.subr.bf16.mxu0 %v1139
    %1322 = vmatpush1.bf16.msra.mxu0 %v1138
    %1323 = vmatprep.subr.bf16.mxu0 %v1142
    %1324 = vmatpush1.bf16.msra.mxu0 %v1141
    %1325 = vmatprep.subr.bf16.mxu0 %v1145
    %1326 = vmatpush1.bf16.msra.mxu0 %v1144
    %1327 = vmatprep.subr.bf16.mxu0 %v1148
    %1328 = vmatpush1.bf16.msra.mxu0 %v1147
    %1329 = vmatprep.subr.bf16.mxu0 %v1151
    %1330 = vmatpush1.bf16.msra.mxu0 %v1150
    %1331 = vmatprep.subr.bf16.mxu0 %v1154
    %1332 = vmatpush1.bf16.msra.mxu0 %v1153
    %1333 = vmatprep.subr.bf16.mxu0 %v1157
    %1334 = vmatpush1.bf16.msra.mxu0 %v1156
    %1335 = vmatprep.subr.bf16.mxu0 %v1160
    %1336 = vmatpush1.bf16.msra.mxu0 %v1159
    %1337 = vmatprep.subr.bf16.mxu0 %v1163
    %1338 = vmatpush1.bf16.msra.mxu0 %v1162
    %1339 = vmatprep.subr.bf16.mxu0 %v1166
    %1340 = vmatpush1.bf16.msra.mxu0 %v1165
    %1341 = vmatprep.subr.bf16.mxu0 %v1169
    %1342 = vmatpush1.bf16.msra.mxu0 %v1168
    %1343 = vmatprep.subr.bf16.mxu0 %v1172
    %1344 = vmatpush1.bf16.msra.mxu0 %v1171
    %1345 = vmatprep.subr.bf16.mxu0 %v1175
    %1346 = vmatpush1.bf16.msra.mxu0 %v1174
    %1347 = vmatprep.subr.bf16.mxu0 %v1178
    %1348 = vmatpush1.bf16.msra.mxu0 %v1177
    %1349 = vmatprep.mubr.bf16.mxu0 %v614
    %1350 = vmatmul.mubr.bf16.gmra.mrb[0].mxu0 %v613
    %v1351 = vpop.f32.mrb[0].mxu0
    %v1352 = vadd.f32 %v1311, %v1351
    %v1353 = vpop.f32.mrb[0].mxu0
    %v1354 = vadd.f32 %v1313, %v1353
    %v1355 = vpop.f32.mrb[0].mxu0
    %v1356 = vpop.f32.mrb[0].mxu0
    %1357 = vdwg.mxu0
    %1358 = vmatprep.subr.bf16.mxu0 0
    %1359 = vmatpush1.bf16.msra.mxu0 %v1086
    %1360 = vmatprep.subr.bf16.mxu0 0
    %1361 = vmatpush1.bf16.msra.mxu0 %v1089
    %1362 = vmatprep.subr.bf16.mxu0 0
    %1363 = vmatpush1.bf16.msra.mxu0 %v1092
    %1364 = vmatprep.subr.bf16.mxu0 0
    %1365 = vmatpush1.bf16.msra.mxu0 %v1095
    %1366 = vmatprep.subr.bf16.mxu0 0
    %1367 = vmatpush1.bf16.msra.mxu0 %v1098
    %1368 = vmatprep.subr.bf16.mxu0 0
    %1369 = vmatpush1.bf16.msra.mxu0 %v1101
    %1370 = vmatprep.subr.bf16.mxu0 0
    %1371 = vmatpush1.bf16.msra.mxu0 %v1104
    %1372 = vmatprep.subr.bf16.mxu0 0
    %1373 = vmatpush1.bf16.msra.mxu0 %v1107
    %1374 = vmatprep.subr.bf16.mxu0 0
    %1375 = vmatpush1.bf16.msra.mxu0 %v1110
    %1376 = vmatprep.subr.bf16.mxu0 0
    %1377 = vmatpush1.bf16.msra.mxu0 %v1113
    %1378 = vmatprep.subr.bf16.mxu0 0
    %1379 = vmatpush1.bf16.msra.mxu0 %v1116
    %1380 = vmatprep.subr.bf16.mxu0 0
    %1381 = vmatpush1.bf16.msra.mxu0 %v1119
    %1382 = vmatprep.subr.bf16.mxu0 0
    %1383 = vmatpush1.bf16.msra.mxu0 %v1122
    %1384 = vmatprep.subr.bf16.mxu0 0
    %1385 = vmatpush1.bf16.msra.mxu0 %v1125
    %1386 = vmatprep.subr.bf16.mxu0 0
    %1387 = vmatpush1.bf16.msra.mxu0 %v1128
    %1388 = vmatprep.subr.bf16.mxu0 0
    %1389 = vmatpush1.bf16.msra.mxu0 %v1131
    %1390 = vmatprep.mubr.bf16.mxu0 %v612
    %1391 = vmatmul.mubr.bf16.gmra.mrb[0].mxu0 %v611
    %v1392 = vpop.f32.mrb[0].mxu0
    %v1393 = vadd.f32 %v760, %v1392
    %v1394 = vpop.f32.mrb[0].mxu0
    %v1395 = vpop.f32.mrb[0].mxu0
    %v1396 = vpop.f32.mrb[0].mxu0
    %1397 = vdwg.mxu0
    %1398 = vmatprep.subr.bf16.mxu0 0
    %1399 = vmatpush1.bf16.msra.mxu0 %v1134
    %1400 = vmatprep.subr.bf16.mxu0 0
    %1401 = vmatpush1.bf16.msra.mxu0 %v1137
    %1402 = vmatprep.subr.bf16.mxu0 0
    %1403 = vmatpush1.bf16.msra.mxu0 %v1140
    %1404 = vmatprep.subr.bf16.mxu0 0
    %1405 = vmatpush1.bf16.msra.mxu0 %v1143
    %1406 = vmatprep.subr.bf16.mxu0 0
    %1407 = vmatpush1.bf16.msra.mxu0 %v1146
    %1408 = vmatprep.subr.bf16.mxu0 0
    %1409 = vmatpush1.bf16.msra.mxu0 %v1149
    %1410 = vmatprep.subr.bf16.mxu0 0
    %1411 = vmatpush1.bf16.msra.mxu0 %v1152
    %1412 = vmatprep.subr.bf16.mxu0 0
    %1413 = vmatpush1.bf16.msra.mxu0 %v1155
    %1414 = vmatprep.subr.bf16.mxu0 0
    %1415 = vmatpush1.bf16.msra.mxu0 %v1158
    %1416 = vmatprep.subr.bf16.mxu0 0
    %1417 = vmatpush1.bf16.msra.mxu0 %v1161
    %1418 = vmatprep.subr.bf16.mxu0 0
    %1419 = vmatpush1.bf16.msra.mxu0 %v1164
    %1420 = vmatprep.subr.bf16.mxu0 0
    %1421 = vmatpush1.bf16.msra.mxu0 %v1167
    %1422 = vmatprep.subr.bf16.mxu0 0
    %1423 = vmatpush1.bf16.msra.mxu0 %v1170
    %1424 = vmatprep.subr.bf16.mxu0 0
    %1425 = vmatpush1.bf16.msra.mxu0 %v1173
    %1426 = vmatprep.subr.bf16.mxu0 0
    %1427 = vmatpush1.bf16.msra.mxu0 %v1176
    %1428 = vmatprep.subr.bf16.mxu0 0
    %1429 = vmatpush1.bf16.msra.mxu0 %v1179
    %1430 = vmatprep.mubr.bf16.mxu0 %v614
    %1431 = vmatmul.mubr.bf16.gmra.mrb[0].mxu0 %v613
    %v1432 = vpop.f32.mrb[0].mxu0
    %v1433 = vadd.f32 %v1393, %v1432
    %v1434 = vpop.f32.mrb[0].mxu0
    %v1435 = vpop.f32.mrb[0].mxu0
    %v1436 = vpop.f32.mrb[0].mxu0
    %1437 = vdwg.mxu0
    %v1438 = vmax.f32 %v1352, 0.0
    %v1439 = vmax.f32 %v1354, 0.0
    %v1440 = vmax.f32 %v1433, 0.0
    %v1441 = vld [vmem:[#allocation11] sm:$0xff]
    %v1442 = vld [vmem:[#allocation11 + $0x8] sm:$0xf]
    %v1443 = vld [vmem:[#allocation11 + $0xc] sm:$0xff]
    %v1444 = vld [vmem:[#allocation11 + $0x14] sm:$0xf]
    %v1445 = vld [vmem:[#allocation11 + $0x18] sm:$0xff]
    %v1446 = vld [vmem:[#allocation11 + $0x20] sm:$0xf]
    %v1447 = vld [vmem:[#allocation11 + $0x24] sm:$0xff]
    %v1448 = vld [vmem:[#allocation11 + $0x2c] sm:$0xf]
    %v1449 = vld [vmem:[#allocation11 + $0x30] sm:$0xff]
    %v1450 = vld [vmem:[#allocation11 + $0x38] sm:$0xf]
    %v1451 = vld [vmem:[#allocation11 + $0x3c] sm:$0xff]
    %v1452 = vld [vmem:[#allocation11 + $0x44] sm:$0xf]
    %v1453 = vld [vmem:[#allocation11 + $0x48] sm:$0xff]
    %v1454 = vld [vmem:[#allocation11 + $0x50] sm:$0xf]
    %v1455 = vld [vmem:[#allocation11 + $0x54] sm:$0xff]
    %v1456 = vld [vmem:[#allocation11 + $0x5c] sm:$0xf]
    %v1457 = vld [vmem:[#allocation11 + $0x60] sm:$0xff]
    %v1458 = vld [vmem:[#allocation11 + $0x68] sm:$0xf]
    %v1459 = vld [vmem:[#allocation11 + $0x6c] sm:$0xff]
    %v1460 = vld [vmem:[#allocation11 + $0x74] sm:$0xf]
    %v1461 = vld [vmem:[#allocation11 + $0x78] sm:$0xff]
    %v1462 = vld [vmem:[#allocation11 + $0x80] sm:$0xf]
    %v1463 = vld [vmem:[#allocation11 + $0x84] sm:$0xff]
    %v1464 = vld [vmem:[#allocation11 + $0x8c] sm:$0xf]
    %v1465 = vld [vmem:[#allocation11 + $0x90] sm:$0xff]
    %v1466 = vld [vmem:[#allocation11 + $0x98] sm:$0xf]
    %v1467 = vld [vmem:[#allocation11 + $0x9c] sm:$0xff]
    %v1468 = vld [vmem:[#allocation11 + $0xa4] sm:$0xf]
    %v1469 = vld [vmem:[#allocation11 + $0xa8] sm:$0xff]
    %v1470 = vld [vmem:[#allocation11 + $0xb0] sm:$0xf]
    %v1471 = vld [vmem:[#allocation11 + $0xb4] sm:$0xff]
    %v1472 = vld [vmem:[#allocation11 + $0xbc] sm:$0xf]
    %v1473 = vld [vmem:[#allocation11 + $0xc0] sm:$0xff]
    %v1474 = vld [vmem:[#allocation11 + $0xc8] sm:$0xf]
    %v1475 = vld [vmem:[#allocation11 + $0xcc] sm:$0xff]
    %v1476 = vld [vmem:[#allocation11 + $0xd4] sm:$0xf]
    %v1477 = vld [vmem:[#allocation11 + $0xd8] sm:$0xff]
    %v1478 = vld [vmem:[#allocation11 + $0xe0] sm:$0xf]
    %v1479 = vld [vmem:[#allocation11 + $0xe4] sm:$0xff]
    %v1480 = vld [vmem:[#allocation11 + $0xec] sm:$0xf]
    %v1481 = vld [vmem:[#allocation11 + $0xf0] sm:$0xff]
    %v1482 = vld [vmem:[#allocation11 + $0xf8] sm:$0xf]
    %v1483 = vld [vmem:[#allocation11 + $0xfc] sm:$0xff]
    %v1484 = vld [vmem:[#allocation11 + $0x104] sm:$0xf]
    %v1485 = vld [vmem:[#allocation11 + $0x108] sm:$0xff]
    %v1486 = vld [vmem:[#allocation11 + $0x110] sm:$0xf]
    %v1487 = vld [vmem:[#allocation11 + $0x114] sm:$0xff]
    %v1488 = vld [vmem:[#allocation11 + $0x11c] sm:$0xf]
    %v1489 = vld [vmem:[#allocation11 + $0x120] sm:$0xff]
    %v1490 = vld [vmem:[#allocation11 + $0x128] sm:$0xf]
    %v1491 = vld [vmem:[#allocation11 + $0x12c] sm:$0xff]
    %v1492 = vld [vmem:[#allocation11 + $0x134] sm:$0xf]
    %v1493 = vld [vmem:[#allocation11 + $0x138] sm:$0xff]
    %v1494 = vld [vmem:[#allocation11 + $0x140] sm:$0xf]
    %v1495 = vld [vmem:[#allocation11 + $0x144] sm:$0xff]
    %v1496 = vld [vmem:[#allocation11 + $0x14c] sm:$0xf]
    %v1497 = vld [vmem:[#allocation11 + $0x150] sm:$0xff]
    %v1498 = vld [vmem:[#allocation11 + $0x158] sm:$0xf]
    %v1499 = vld [vmem:[#allocation11 + $0x15c] sm:$0xff]
    %v1500 = vld [vmem:[#allocation11 + $0x164] sm:$0xf]
    %v1501 = vld [vmem:[#allocation11 + $0x168] sm:$0xff]
    %v1502 = vld [vmem:[#allocation11 + $0x170] sm:$0xf]
    %v1503 = vld [vmem:[#allocation11 + $0x174] sm:$0xff]
    %v1504 = vld [vmem:[#allocation11 + $0x17c] sm:$0xf]
    %v1505 = vld [vmem:[#allocation11 + $0x180] sm:$0xff]
    %v1506 = vld [vmem:[#allocation11 + $0x188] sm:$0xf]
    %v1507 = vld [vmem:[#allocation11 + $0x18c] sm:$0xff]
    %v1508 = vld [vmem:[#allocation11 + $0x194] sm:$0xf]
    %v1509 = vld [vmem:[#allocation11 + $0x198] sm:$0xff]
    %v1510 = vld [vmem:[#allocation11 + $0x1a0] sm:$0xf]
    %v1511 = vld [vmem:[#allocation11 + $0x1a4] sm:$0xff]
    %v1512 = vld [vmem:[#allocation11 + $0x1ac] sm:$0xf]
    %v1513 = vld [vmem:[#allocation11 + $0x1b0] sm:$0xff]
    %v1514 = vld [vmem:[#allocation11 + $0x1b8] sm:$0xf]
    %v1515 = vld [vmem:[#allocation11 + $0x1bc] sm:$0xff]
    %v1516 = vld [vmem:[#allocation11 + $0x1c4] sm:$0xf]
    %v1517 = vld [vmem:[#allocation11 + $0x1c8] sm:$0xff]
    %v1518 = vld [vmem:[#allocation11 + $0x1d0] sm:$0xf]
    %v1519 = vld [vmem:[#allocation11 + $0x1d4] sm:$0xff]
    %v1520 = vld [vmem:[#allocation11 + $0x1dc] sm:$0xf]
    %v1521 = vld [vmem:[#allocation11 + $0x1e0] sm:$0xff]
    %v1522 = vld [vmem:[#allocation11 + $0x1e8] sm:$0xf]
    %v1523 = vld [vmem:[#allocation11 + $0x1ec] sm:$0xff]
    %v1524 = vld [vmem:[#allocation11 + $0x1f4] sm:$0xf]
    %v1525 = vld [vmem:[#allocation11 + $0x1f8] sm:$0xff]
    %v1526 = vld [vmem:[#allocation11 + $0x200] sm:$0xf]
    %v1527 = vld [vmem:[#allocation11 + $0x204] sm:$0xff]
    %v1528 = vld [vmem:[#allocation11 + $0x20c] sm:$0xf]
    %v1529 = vld [vmem:[#allocation11 + $0x210] sm:$0xff]
    %v1530 = vld [vmem:[#allocation11 + $0x218] sm:$0xf]
    %v1531 = vld [vmem:[#allocation11 + $0x21c] sm:$0xff]
    %v1532 = vld [vmem:[#allocation11 + $0x224] sm:$0xf]
    %v1533 = vld [vmem:[#allocation11 + $0x228] sm:$0xff]
    %v1534 = vld [vmem:[#allocation11 + $0x230] sm:$0xf]
    %v1535 = vld [vmem:[#allocation11 + $0x234] sm:$0xff]
    %v1536 = vld [vmem:[#allocation11 + $0x23c] sm:$0xf]
    %v1537 = vld [vmem:[#allocation11 + $0x240] sm:$0xff]
    %v1538 = vld [vmem:[#allocation11 + $0x248] sm:$0xf]
    %v1539 = vld [vmem:[#allocation11 + $0x24c] sm:$0xff]
    %v1540 = vld [vmem:[#allocation11 + $0x254] sm:$0xf]
    %v1541 = vld [vmem:[#allocation11 + $0x258] sm:$0xff]
    %v1542 = vld [vmem:[#allocation11 + $0x260] sm:$0xf]
    %v1543 = vld [vmem:[#allocation11 + $0x264] sm:$0xff]
    %v1544 = vld [vmem:[#allocation11 + $0x26c] sm:$0xf]
    %v1545 = vld [vmem:[#allocation11 + $0x270] sm:$0xff]
    %v1546 = vld [vmem:[#allocation11 + $0x278] sm:$0xf]
    %v1547 = vld [vmem:[#allocation11 + $0x27c] sm:$0xff]
    %v1548 = vld [vmem:[#allocation11 + $0x284] sm:$0xf]
    %v1549 = vld [vmem:[#allocation11 + $0x288] sm:$0xff]
    %v1550 = vld [vmem:[#allocation11 + $0x290] sm:$0xf]
    %v1551 = vld [vmem:[#allocation11 + $0x294] sm:$0xff]
    %v1552 = vld [vmem:[#allocation11 + $0x29c] sm:$0xf]
    %v1553 = vld [vmem:[#allocation11 + $0x2a0] sm:$0xff]
    %v1554 = vld [vmem:[#allocation11 + $0x2a8] sm:$0xf]
    %v1555 = vld [vmem:[#allocation11 + $0x2ac] sm:$0xff]
    %v1556 = vld [vmem:[#allocation11 + $0x2b4] sm:$0xf]
    %v1557 = vld [vmem:[#allocation11 + $0x2b8] sm:$0xff]
    %v1558 = vld [vmem:[#allocation11 + $0x2c0] sm:$0xf]
    %v1559 = vld [vmem:[#allocation11 + $0x2c4] sm:$0xff]
    %v1560 = vld [vmem:[#allocation11 + $0x2cc] sm:$0xf]
    %v1561 = vld [vmem:[#allocation11 + $0x2d0] sm:$0xff]
    %v1562 = vld [vmem:[#allocation11 + $0x2d8] sm:$0xf]
    %v1563 = vld [vmem:[#allocation11 + $0x2dc] sm:$0xff]
    %v1564 = vld [vmem:[#allocation11 + $0x2e4] sm:$0xf]
    %v1565 = vld [vmem:[#allocation11 + $0x2e8] sm:$0xff]
    %v1566 = vld [vmem:[#allocation11 + $0x2f0] sm:$0xf]
    %v1567 = vld [vmem:[#allocation11 + $0x2f4] sm:$0xff]
    %v1568 = vld [vmem:[#allocation11 + $0x2fc] sm:$0xf]
    %v1569 = vld [vmem:[%s8] sm:$0x7]
    %v1571 = vlaneseq
    %v1572 = vshrl.u32 %v1571, 7
    %v1573 = vsub.s32 0, %v1572
    %v1574 = vrot.slane %v1569, %v1573
    %v1575 = vlaneseq
    %v1576 = vshrl.u32 %v1575, 7
    %v1577 = vsub.s32 1, %v1576
    %v1578 = vrot.slane %v1569, %v1577
    %v1579 = vlaneseq
    %v1580 = vshrl.u32 %v1579, 7
    %v1581 = vsub.s32 2, %v1580
    %v1582 = vrot.slane %v1569, %v1581
    %v1714 = vunpack.c.l.b16 %v1441
    %v1715 = vunpack.c.h.b16 %v1441
    %v1716 = vunpack.c.l.b16 %v1442
    %v1717 = vunpack.c.l.b16 %v1443
    %v1718 = vunpack.c.h.b16 %v1443
    %v1719 = vunpack.c.l.b16 %v1444
    %v1720 = vunpack.c.l.b16 %v1445
    %v1721 = vunpack.c.h.b16 %v1445
    %v1722 = vunpack.c.l.b16 %v1446
    %v1723 = vunpack.c.l.b16 %v1447
    %v1724 = vunpack.c.h.b16 %v1447
    %v1725 = vunpack.c.l.b16 %v1448
    %v1726 = vunpack.c.l.b16 %v1449
    %v1727 = vunpack.c.h.b16 %v1449
    %v1728 = vunpack.c.l.b16 %v1450
    %v1729 = vunpack.c.l.b16 %v1451
    %v1730 = vunpack.c.h.b16 %v1451
    %v1731 = vunpack.c.l.b16 %v1452
    %v1732 = vunpack.c.l.b16 %v1453
    %v1733 = vunpack.c.h.b16 %v1453
    %v1734 = vunpack.c.l.b16 %v1454
    %v1735 = vunpack.c.l.b16 %v1455
    %v1736 = vunpack.c.h.b16 %v1455
    %v1737 = vunpack.c.l.b16 %v1456
    %v1738 = vunpack.c.l.b16 %v1457
    %v1739 = vunpack.c.h.b16 %v1457
    %v1740 = vunpack.c.l.b16 %v1458
    %v1741 = vunpack.c.l.b16 %v1459
    %v1742 = vunpack.c.h.b16 %v1459
    %v1743 = vunpack.c.l.b16 %v1460
    %v1744 = vunpack.c.l.b16 %v1461
    %v1745 = vunpack.c.h.b16 %v1461
    %v1746 = vunpack.c.l.b16 %v1462
    %v1747 = vunpack.c.l.b16 %v1463
    %v1748 = vunpack.c.h.b16 %v1463
    %v1749 = vunpack.c.l.b16 %v1464
    %v1750 = vunpack.c.l.b16 %v1465
    %v1751 = vunpack.c.h.b16 %v1465
    %v1752 = vunpack.c.l.b16 %v1466
    %v1753 = vunpack.c.l.b16 %v1467
    %v1754 = vunpack.c.h.b16 %v1467
    %v1755 = vunpack.c.l.b16 %v1468
    %v1756 = vunpack.c.l.b16 %v1469
    %v1757 = vunpack.c.h.b16 %v1469
    %v1758 = vunpack.c.l.b16 %v1470
    %v1759 = vunpack.c.l.b16 %v1471
    %v1760 = vunpack.c.h.b16 %v1471
    %v1761 = vunpack.c.l.b16 %v1472
    %v1762 = vunpack.c.l.b16 %v1473
    %v1763 = vunpack.c.h.b16 %v1473
    %v1764 = vunpack.c.l.b16 %v1474
    %v1765 = vunpack.c.l.b16 %v1475
    %v1766 = vunpack.c.h.b16 %v1475
    %v1767 = vunpack.c.l.b16 %v1476
    %v1768 = vunpack.c.l.b16 %v1477
    %v1769 = vunpack.c.h.b16 %v1477
    %v1770 = vunpack.c.l.b16 %v1478
    %v1771 = vunpack.c.l.b16 %v1479
    %v1772 = vunpack.c.h.b16 %v1479
    %v1773 = vunpack.c.l.b16 %v1480
    %v1774 = vunpack.c.l.b16 %v1481
    %v1775 = vunpack.c.h.b16 %v1481
    %v1776 = vunpack.c.l.b16 %v1482
    %v1777 = vunpack.c.l.b16 %v1483
    %v1778 = vunpack.c.h.b16 %v1483
    %v1779 = vunpack.c.l.b16 %v1484
    %v1780 = vunpack.c.l.b16 %v1485
    %v1781 = vunpack.c.h.b16 %v1485
    %v1782 = vunpack.c.l.b16 %v1486
    %v1783 = vunpack.c.l.b16 %v1487
    %v1784 = vunpack.c.h.b16 %v1487
    %v1785 = vunpack.c.l.b16 %v1488
    %v1786 = vunpack.c.l.b16 %v1489
    %v1787 = vunpack.c.h.b16 %v1489
    %v1788 = vunpack.c.l.b16 %v1490
    %v1789 = vunpack.c.l.b16 %v1491
    %v1790 = vunpack.c.h.b16 %v1491
    %v1791 = vunpack.c.l.b16 %v1492
    %v1792 = vunpack.c.l.b16 %v1493
    %v1793 = vunpack.c.h.b16 %v1493
    %v1794 = vunpack.c.l.b16 %v1494
    %v1795 = vunpack.c.l.b16 %v1495
    %v1796 = vunpack.c.h.b16 %v1495
    %v1797 = vunpack.c.l.b16 %v1496
    %v1798 = vunpack.c.l.b16 %v1497
    %v1799 = vunpack.c.h.b16 %v1497
    %v1800 = vunpack.c.l.b16 %v1498
    %v1801 = vunpack.c.l.b16 %v1499
    %v1802 = vunpack.c.h.b16 %v1499
    %v1803 = vunpack.c.l.b16 %v1500
    %v1804 = vunpack.c.l.b16 %v1501
    %v1805 = vunpack.c.h.b16 %v1501
    %v1806 = vunpack.c.l.b16 %v1502
    %v1807 = vunpack.c.l.b16 %v1503
    %v1808 = vunpack.c.h.b16 %v1503
    %v1809 = vunpack.c.l.b16 %v1504
    %v1810 = vunpack.c.l.b16 %v1505
    %v1811 = vunpack.c.h.b16 %v1505
    %v1812 = vunpack.c.l.b16 %v1506
    %v1813 = vunpack.c.l.b16 %v1507
    %v1814 = vunpack.c.h.b16 %v1507
    %v1815 = vunpack.c.l.b16 %v1508
    %v1816 = vunpack.c.l.b16 %v1509
    %v1817 = vunpack.c.h.b16 %v1509
    %v1818 = vunpack.c.l.b16 %v1510
    %v1819 = vunpack.c.l.b16 %v1511
    %v1820 = vunpack.c.h.b16 %v1511
    %v1821 = vunpack.c.l.b16 %v1512
    %v1822 = vunpack.c.l.b16 %v1513
    %v1823 = vunpack.c.h.b16 %v1513
    %v1824 = vunpack.c.l.b16 %v1514
    %v1825 = vunpack.c.l.b16 %v1515
    %v1826 = vunpack.c.h.b16 %v1515
    %v1827 = vunpack.c.l.b16 %v1516
    %v1828 = vunpack.c.l.b16 %v1517
    %v1829 = vunpack.c.h.b16 %v1517
    %v1830 = vunpack.c.l.b16 %v1518
    %v1831 = vunpack.c.l.b16 %v1519
    %v1832 = vunpack.c.h.b16 %v1519
    %v1833 = vunpack.c.l.b16 %v1520
    %v1834 = vunpack.c.l.b16 %v1521
    %v1835 = vunpack.c.h.b16 %v1521
    %v1836 = vunpack.c.l.b16 %v1522
    %v1837 = vunpack.c.l.b16 %v1523
    %v1838 = vunpack.c.h.b16 %v1523
    %v1839 = vunpack.c.l.b16 %v1524
    %v1840 = vunpack.c.l.b16 %v1525
    %v1841 = vunpack.c.h.b16 %v1525
    %v1842 = vunpack.c.l.b16 %v1526
    %v1843 = vunpack.c.l.b16 %v1527
    %v1844 = vunpack.c.h.b16 %v1527
    %v1845 = vunpack.c.l.b16 %v1528
    %v1846 = vunpack.c.l.b16 %v1529
    %v1847 = vunpack.c.h.b16 %v1529
    %v1848 = vunpack.c.l.b16 %v1530
    %v1849 = vunpack.c.l.b16 %v1531
    %v1850 = vunpack.c.h.b16 %v1531
    %v1851 = vunpack.c.l.b16 %v1532
    %v1852 = vunpack.c.l.b16 %v1533
    %v1853 = vunpack.c.h.b16 %v1533
    %v1854 = vunpack.c.l.b16 %v1534
    %v1855 = vunpack.c.l.b16 %v1535
    %v1856 = vunpack.c.h.b16 %v1535
    %v1857 = vunpack.c.l.b16 %v1536
    %v1858 = vunpack.c.l.b16 %v1537
    %v1859 = vunpack.c.h.b16 %v1537
    %v1860 = vunpack.c.l.b16 %v1538
    %v1861 = vunpack.c.l.b16 %v1539
    %v1862 = vunpack.c.h.b16 %v1539
    %v1863 = vunpack.c.l.b16 %v1540
    %v1864 = vunpack.c.l.b16 %v1541
    %v1865 = vunpack.c.h.b16 %v1541
    %v1866 = vunpack.c.l.b16 %v1542
    %v1867 = vunpack.c.l.b16 %v1543
    %v1868 = vunpack.c.h.b16 %v1543
    %v1869 = vunpack.c.l.b16 %v1544
    %v1870 = vunpack.c.l.b16 %v1545
    %v1871 = vunpack.c.h.b16 %v1545
    %v1872 = vunpack.c.l.b16 %v1546
    %v1873 = vunpack.c.l.b16 %v1547
    %v1874 = vunpack.c.h.b16 %v1547
    %v1875 = vunpack.c.l.b16 %v1548
    %v1876 = vunpack.c.l.b16 %v1549
    %v1877 = vunpack.c.h.b16 %v1549
    %v1878 = vunpack.c.l.b16 %v1550
    %v1879 = vunpack.c.l.b16 %v1551
    %v1880 = vunpack.c.h.b16 %v1551
    %v1881 = vunpack.c.l.b16 %v1552
    %v1882 = vunpack.c.l.b16 %v1553
    %v1883 = vunpack.c.h.b16 %v1553
    %v1884 = vunpack.c.l.b16 %v1554
    %v1885 = vunpack.c.l.b16 %v1555
    %v1886 = vunpack.c.h.b16 %v1555
    %v1887 = vunpack.c.l.b16 %v1556
    %v1888 = vunpack.c.l.b16 %v1557
    %v1889 = vunpack.c.h.b16 %v1557
    %v1890 = vunpack.c.l.b16 %v1558
    %v1891 = vunpack.c.l.b16 %v1559
    %v1892 = vunpack.c.h.b16 %v1559
    %v1893 = vunpack.c.l.b16 %v1560
    %v1894 = vunpack.c.l.b16 %v1561
    %v1895 = vunpack.c.h.b16 %v1561
    %v1896 = vunpack.c.l.b16 %v1562
    %v1897 = vunpack.c.l.b16 %v1563
    %v1898 = vunpack.c.h.b16 %v1563
    %v1899 = vunpack.c.l.b16 %v1564
    %v1900 = vunpack.c.l.b16 %v1565
    %v1901 = vunpack.c.h.b16 %v1565
    %v1902 = vunpack.c.l.b16 %v1566
    %v1903 = vunpack.c.l.b16 %v1567
    %v1904 = vunpack.c.h.b16 %v1567
    %v1905 = vunpack.c.l.b16 %v1568
    %v1906 = vpack.c.b16 %v1717, %v1714
    %v1907 = vpack.c.b16 %v1718, %v1715
    %v1908 = vpack.c.b16 %v1719, %v1716
    %v1909 = vpack.c.b16 %v1723, %v1720
    %v1910 = vpack.c.b16 %v1724, %v1721
    %v1911 = vpack.c.b16 %v1725, %v1722
    %v1912 = vpack.c.b16 %v1729, %v1726
    %v1913 = vpack.c.b16 %v1730, %v1727
    %v1914 = vpack.c.b16 %v1731, %v1728
    %v1915 = vpack.c.b16 %v1735, %v1732
    %v1916 = vpack.c.b16 %v1736, %v1733
    %v1917 = vpack.c.b16 %v1737, %v1734
    %v1918 = vpack.c.b16 %v1741, %v1738
    %v1919 = vpack.c.b16 %v1742, %v1739
    %v1920 = vpack.c.b16 %v1743, %v1740
    %v1921 = vpack.c.b16 %v1747, %v1744
    %v1922 = vpack.c.b16 %v1748, %v1745
    %v1923 = vpack.c.b16 %v1749, %v1746
    %v1924 = vpack.c.b16 %v1753, %v1750
    %v1925 = vpack.c.b16 %v1754, %v1751
    %v1926 = vpack.c.b16 %v1755, %v1752
    %v1927 = vpack.c.b16 %v1759, %v1756
    %v1928 = vpack.c.b16 %v1760, %v1757
    %v1929 = vpack.c.b16 %v1761, %v1758
    %v1930 = vpack.c.b16 %v1765, %v1762
    %v1931 = vpack.c.b16 %v1766, %v1763
    %v1932 = vpack.c.b16 %v1767, %v1764
    %v1933 = vpack.c.b16 %v1771, %v1768
    %v1934 = vpack.c.b16 %v1772, %v1769
    %v1935 = vpack.c.b16 %v1773, %v1770
    %v1936 = vpack.c.b16 %v1777, %v1774
    %v1937 = vpack.c.b16 %v1778, %v1775
    %v1938 = vpack.c.b16 %v1779, %v1776
    %v1939 = vpack.c.b16 %v1783, %v1780
    %v1940 = vpack.c.b16 %v1784, %v1781
    %v1941 = vpack.c.b16 %v1785, %v1782
    %v1942 = vpack.c.b16 %v1789, %v1786
    %v1943 = vpack.c.b16 %v1790, %v1787
    %v1944 = vpack.c.b16 %v1791, %v1788
    %v1945 = vpack.c.b16 %v1795, %v1792
    %v1946 = vpack.c.b16 %v1796, %v1793
    %v1947 = vpack.c.b16 %v1797, %v1794
    %v1948 = vpack.c.b16 %v1801, %v1798
    %v1949 = vpack.c.b16 %v1802, %v1799
    %v1950 = vpack.c.b16 %v1803, %v1800
    %v1951 = vpack.c.b16 %v1807, %v1804
    %v1952 = vpack.c.b16 %v1808, %v1805
    %v1953 = vpack.c.b16 %v1809, %v1806
    %v1954 = vpack.c.b16 %v1813, %v1810
    %v1955 = vpack.c.b16 %v1814, %v1811
    %v1956 = vpack.c.b16 %v1815, %v1812
    %v1957 = vpack.c.b16 %v1819, %v1816
    %v1958 = vpack.c.b16 %v1820, %v1817
    %v1959 = vpack.c.b16 %v1821, %v1818
    %v1960 = vpack.c.b16 %v1825, %v1822
    %v1961 = vpack.c.b16 %v1826, %v1823
    %v1962 = vpack.c.b16 %v1827, %v1824
    %v1963 = vpack.c.b16 %v1831, %v1828
    %v1964 = vpack.c.b16 %v1832, %v1829
    %v1965 = vpack.c.b16 %v1833, %v1830
    %v1966 = vpack.c.b16 %v1837, %v1834
    %v1967 = vpack.c.b16 %v1838, %v1835
    %v1968 = vpack.c.b16 %v1839, %v1836
    %v1969 = vpack.c.b16 %v1843, %v1840
    %v1970 = vpack.c.b16 %v1844, %v1841
    %v1971 = vpack.c.b16 %v1845, %v1842
    %v1972 = vpack.c.b16 %v1849, %v1846
    %v1973 = vpack.c.b16 %v1850, %v1847
    %v1974 = vpack.c.b16 %v1851, %v1848
    %v1975 = vpack.c.b16 %v1855, %v1852
    %v1976 = vpack.c.b16 %v1856, %v1853
    %v1977 = vpack.c.b16 %v1857, %v1854
    %v1978 = vpack.c.b16 %v1861, %v1858
    %v1979 = vpack.c.b16 %v1862, %v1859
    %v1980 = vpack.c.b16 %v1863, %v1860
    %v1981 = vpack.c.b16 %v1867, %v1864
    %v1982 = vpack.c.b16 %v1868, %v1865
    %v1983 = vpack.c.b16 %v1869, %v1866
    %v1984 = vpack.c.b16 %v1873, %v1870
    %v1985 = vpack.c.b16 %v1874, %v1871
    %v1986 = vpack.c.b16 %v1875, %v1872
    %v1987 = vpack.c.b16 %v1879, %v1876
    %v1988 = vpack.c.b16 %v1880, %v1877
    %v1989 = vpack.c.b16 %v1881, %v1878
    %v1990 = vpack.c.b16 %v1885, %v1882
    %v1991 = vpack.c.b16 %v1886, %v1883
    %v1992 = vpack.c.b16 %v1887, %v1884
    %v1993 = vpack.c.b16 %v1891, %v1888
    %v1994 = vpack.c.b16 %v1892, %v1889
    %v1995 = vpack.c.b16 %v1893, %v1890
    %v1996 = vpack.c.b16 %v1897, %v1894
    %v1997 = vpack.c.b16 %v1898, %v1895
    %v1998 = vpack.c.b16 %v1899, %v1896
    %v1999 = vpack.c.b16 %v1903, %v1900
    %v2000 = vpack.c.b16 %v1904, %v1901
    %v2001 = vpack.c.b16 %v1905, %v1902
    %2098 = vmatprep.subr.bf16.mxu0 %v1907
    %2099 = vmatpush1.bf16.msra.mxu0 %v1906
    %2100 = vmatprep.subr.bf16.mxu0 %v1910
    %2101 = vmatpush1.bf16.msra.mxu0 %v1909
    %2102 = vmatprep.subr.bf16.mxu0 %v1913
    %2103 = vmatpush1.bf16.msra.mxu0 %v1912
    %2104 = vmatprep.subr.bf16.mxu0 %v1916
    %2105 = vmatpush1.bf16.msra.mxu0 %v1915
    %2106 = vmatprep.subr.bf16.mxu0 %v1919
    %2107 = vmatpush1.bf16.msra.mxu0 %v1918
    %2108 = vmatprep.subr.bf16.mxu0 %v1922
    %2109 = vmatpush1.bf16.msra.mxu0 %v1921
    %2110 = vmatprep.subr.bf16.mxu0 %v1925
    %2111 = vmatpush1.bf16.msra.mxu0 %v1924
    %2112 = vmatprep.subr.bf16.mxu0 %v1928
    %2113 = vmatpush1.bf16.msra.mxu0 %v1927
    %2114 = vmatprep.subr.bf16.mxu0 %v1931
    %2115 = vmatpush1.bf16.msra.mxu0 %v1930
    %2116 = vmatprep.subr.bf16.mxu0 %v1934
    %2117 = vmatpush1.bf16.msra.mxu0 %v1933
    %2118 = vmatprep.subr.bf16.mxu0 %v1937
    %2119 = vmatpush1.bf16.msra.mxu0 %v1936
    %2120 = vmatprep.subr.bf16.mxu0 %v1940
    %2121 = vmatpush1.bf16.msra.mxu0 %v1939
    %2122 = vmatprep.subr.bf16.mxu0 %v1943
    %2123 = vmatpush1.bf16.msra.mxu0 %v1942
    %2124 = vmatprep.subr.bf16.mxu0 %v1946
    %2125 = vmatpush1.bf16.msra.mxu0 %v1945
    %2126 = vmatprep.subr.bf16.mxu0 %v1949
    %2127 = vmatpush1.bf16.msra.mxu0 %v1948
    %2128 = vmatprep.subr.bf16.mxu0 %v1952
    %2129 = vmatpush1.bf16.msra.mxu0 %v1951
    %2130 = vmatprep.mubr.bf16.mxu0 %v616
    %2131 = vmatmul.mubr.bf16.gmra.mrb[0].mxu0 %v615
    %v2132 = vpop.f32.mrb[0].mxu0
    %v2133 = vadd.f32 %v1574, %v2132
    %v2134 = vpop.f32.mrb[0].mxu0
    %v2135 = vadd.f32 %v1578, %v2134
    %v2136 = vpop.f32.mrb[0].mxu0
    %v2137 = vpop.f32.mrb[0].mxu0
    %2138 = vdwg.mxu0
    %2139 = vmatprep.subr.bf16.mxu0 %v1955
    %2140 = vmatpush1.bf16.msra.mxu0 %v1954
    %2141 = vmatprep.subr.bf16.mxu0 %v1958
    %2142 = vmatpush1.bf16.msra.mxu0 %v1957
    %2143 = vmatprep.subr.bf16.mxu0 %v1961
    %2144 = vmatpush1.bf16.msra.mxu0 %v1960
    %2145 = vmatprep.subr.bf16.mxu0 %v1964
    %2146 = vmatpush1.bf16.msra.mxu0 %v1963
    %2147 = vmatprep.subr.bf16.mxu0 %v1967
    %2148 = vmatpush1.bf16.msra.mxu0 %v1966
    %2149 = vmatprep.subr.bf16.mxu0 %v1970
    %2150 = vmatpush1.bf16.msra.mxu0 %v1969
    %2151 = vmatprep.subr.bf16.mxu0 %v1973
    %2152 = vmatpush1.bf16.msra.mxu0 %v1972
    %2153 = vmatprep.subr.bf16.mxu0 %v1976
    %2154 = vmatpush1.bf16.msra.mxu0 %v1975
    %2155 = vmatprep.subr.bf16.mxu0 %v1979
    %2156 = vmatpush1.bf16.msra.mxu0 %v1978
    %2157 = vmatprep.subr.bf16.mxu0 %v1982
    %2158 = vmatpush1.bf16.msra.mxu0 %v1981
    %2159 = vmatprep.subr.bf16.mxu0 %v1985
    %2160 = vmatpush1.bf16.msra.mxu0 %v1984
    %2161 = vmatprep.subr.bf16.mxu0 %v1988
    %2162 = vmatpush1.bf16.msra.mxu0 %v1987
    %2163 = vmatprep.subr.bf16.mxu0 %v1991
    %2164 = vmatpush1.bf16.msra.mxu0 %v1990
    %2165 = vmatprep.subr.bf16.mxu0 %v1994
    %2166 = vmatpush1.bf16.msra.mxu0 %v1993
    %2167 = vmatprep.subr.bf16.mxu0 %v1997
    %2168 = vmatpush1.bf16.msra.mxu0 %v1996
    %2169 = vmatprep.subr.bf16.mxu0 %v2000
    %2170 = vmatpush1.bf16.msra.mxu0 %v1999
    %2171 = vmatprep.mubr.bf16.mxu0 %v618
    %2172 = vmatmul.mubr.bf16.gmra.mrb[0].mxu0 %v617
    %v2173 = vpop.f32.mrb[0].mxu0
    %v2174 = vadd.f32 %v2133, %v2173
    %v2175 = vpop.f32.mrb[0].mxu0
    %v2176 = vadd.f32 %v2135, %v2175
    %v2177 = vpop.f32.mrb[0].mxu0
    %v2178 = vpop.f32.mrb[0].mxu0
    %2179 = vdwg.mxu0
    %2180 = vmatprep.subr.bf16.mxu0 0
    %2181 = vmatpush1.bf16.msra.mxu0 %v1908
    %2182 = vmatprep.subr.bf16.mxu0 0
    %2183 = vmatpush1.bf16.msra.mxu0 %v1911
    %2184 = vmatprep.subr.bf16.mxu0 0
    %2185 = vmatpush1.bf16.msra.mxu0 %v1914
    %2186 = vmatprep.subr.bf16.mxu0 0
    %2187 = vmatpush1.bf16.msra.mxu0 %v1917
    %2188 = vmatprep.subr.bf16.mxu0 0
    %2189 = vmatpush1.bf16.msra.mxu0 %v1920
    %2190 = vmatprep.subr.bf16.mxu0 0
    %2191 = vmatpush1.bf16.msra.mxu0 %v1923
    %2192 = vmatprep.subr.bf16.mxu0 0
    %2193 = vmatpush1.bf16.msra.mxu0 %v1926
    %2194 = vmatprep.subr.bf16.mxu0 0
    %2195 = vmatpush1.bf16.msra.mxu0 %v1929
    %2196 = vmatprep.subr.bf16.mxu0 0
    %2197 = vmatpush1.bf16.msra.mxu0 %v1932
    %2198 = vmatprep.subr.bf16.mxu0 0
    %2199 = vmatpush1.bf16.msra.mxu0 %v1935
    %2200 = vmatprep.subr.bf16.mxu0 0
    %2201 = vmatpush1.bf16.msra.mxu0 %v1938
    %2202 = vmatprep.subr.bf16.mxu0 0
    %2203 = vmatpush1.bf16.msra.mxu0 %v1941
    %2204 = vmatprep.subr.bf16.mxu0 0
    %2205 = vmatpush1.bf16.msra.mxu0 %v1944
    %2206 = vmatprep.subr.bf16.mxu0 0
    %2207 = vmatpush1.bf16.msra.mxu0 %v1947
    %2208 = vmatprep.subr.bf16.mxu0 0
    %2209 = vmatpush1.bf16.msra.mxu0 %v1950
    %2210 = vmatprep.subr.bf16.mxu0 0
    %2211 = vmatpush1.bf16.msra.mxu0 %v1953
    %2212 = vmatprep.mubr.bf16.mxu0 %v616
    %2213 = vmatmul.mubr.bf16.gmra.mrb[0].mxu0 %v615
    %v2214 = vpop.f32.mrb[0].mxu0
    %v2215 = vadd.f32 %v1582, %v2214
    %v2216 = vpop.f32.mrb[0].mxu0
    %v2217 = vpop.f32.mrb[0].mxu0
    %v2218 = vpop.f32.mrb[0].mxu0
    %2219 = vdwg.mxu0
    %2220 = vmatprep.subr.bf16.mxu0 0
    %2221 = vmatpush1.bf16.msra.mxu0 %v1956
    %2222 = vmatprep.subr.bf16.mxu0 0
    %2223 = vmatpush1.bf16.msra.mxu0 %v1959
    %2224 = vmatprep.subr.bf16.mxu0 0
    %2225 = vmatpush1.bf16.msra.mxu0 %v1962
    %2226 = vmatprep.subr.bf16.mxu0 0
    %2227 = vmatpush1.bf16.msra.mxu0 %v1965
    %2228 = vmatprep.subr.bf16.mxu0 0
    %2229 = vmatpush1.bf16.msra.mxu0 %v1968
    %2230 = vmatprep.subr.bf16.mxu0 0
    %2231 = vmatpush1.bf16.msra.mxu0 %v1971
    %2232 = vmatprep.subr.bf16.mxu0 0
    %2233 = vmatpush1.bf16.msra.mxu0 %v1974
    %2234 = vmatprep.subr.bf16.mxu0 0
    %2235 = vmatpush1.bf16.msra.mxu0 %v1977
    %2236 = vmatprep.subr.bf16.mxu0 0
    %2237 = vmatpush1.bf16.msra.mxu0 %v1980
    %2238 = vmatprep.subr.bf16.mxu0 0
    %2239 = vmatpush1.bf16.msra.mxu0 %v1983
    %2240 = vmatprep.subr.bf16.mxu0 0
    %2241 = vmatpush1.bf16.msra.mxu0 %v1986
    %2242 = vmatprep.subr.bf16.mxu0 0
    %2243 = vmatpush1.bf16.msra.mxu0 %v1989
    %2244 = vmatprep.subr.bf16.mxu0 0
    %2245 = vmatpush1.bf16.msra.mxu0 %v1992
    %2246 = vmatprep.subr.bf16.mxu0 0
    %2247 = vmatpush1.bf16.msra.mxu0 %v1995
    %2248 = vmatprep.subr.bf16.mxu0 0
    %2249 = vmatpush1.bf16.msra.mxu0 %v1998
    %2250 = vmatprep.subr.bf16.mxu0 0
    %2251 = vmatpush1.bf16.msra.mxu0 %v2001
    %2252 = vmatprep.mubr.bf16.mxu0 %v618
    %2253 = vmatmul.mubr.bf16.gmra.mrb[0].mxu0 %v617
    %v2254 = vpop.f32.mrb[0].mxu0
    %v2255 = vadd.f32 %v2215, %v2254
    %v2256 = vpop.f32.mrb[0].mxu0
    %v2257 = vpop.f32.mrb[0].mxu0
    %v2258 = vpop.f32.mrb[0].mxu0
    %2259 = vdwg.mxu0
    %v2260 = vmax.f32 %v2174, 0.0
    %v2261 = vmax.f32 %v2176, 0.0
    %v2262 = vmax.f32 %v2255, 0.0
    %v2263 = vld [vmem:[%s9] sm:$0x3f]
    %v2265 = vlaneseq
    %v2266 = vshrl.u32 %v2265, 7
    %v2267 = vsub.s32 0, %v2266
    %v2268 = vrot.slane %v2263, %v2267
    %v2269 = vlaneseq
    %v2270 = vshrl.u32 %v2269, 7
    %v2271 = vsub.s32 2, %v2270
    %v2272 = vrot.slane %v2263, %v2271
    %v2273 = vlaneseq
    %v2274 = vshrl.u32 %v2273, 7
    %v2275 = vsub.s32 4, %v2274
    %v2276 = vrot.slane %v2263, %v2275
    %v2280 = vlaneseq
    %v2281 = vshrl.u32 %v2280, 7
    %v2282 = vsub.s32 0, %v2281
    %v2283 = vrot.slane %v2268, %v2282
    %v2284 = vlaneseq
    %v2285 = vshrl.u32 %v2284, 7
    %v2286 = vsub.s32 0, %v2285
    %v2287 = vrot.slane %v2272, %v2286
    %v2288 = vlaneseq
    %v2289 = vshrl.u32 %v2288, 7
    %v2290 = vsub.s32 0, %v2289
    %v2291 = vrot.slane %v2276, %v2290
    %v2292 = vmul.f32 %v1438, %v2283
    %v2293 = vmul.f32 %v1439, %v2287
    %v2294 = vmul.f32 %v1440, %v2291
    %vm2295 = vcmask 1041408
    %v2296 = vsel %vm2295, %v2292, 0.0
    %v2297 = vsel %vm2295, %v2293, 0.0
    %v2298 = vadd.f32 %v2296, %v2297
    %v2299 = vsel %vm2295, %v2294, 0.0
    %v2300 = vadd.f32 %v2298, %v2299
    %2301 = vadd.xlane.f32.xlu0 %v2300
    %v2302 = vpop.xlane.xlu0 %2301
    %v2303 = vld [vmem:[%s10] sm:$0x1]
    %v2305 = vlaneseq
    %v2306 = vshrl.u32 %v2305, 7
    %v2307 = vsub.s32 0, %v2306
    %v2308 = vrot.slane %v2303, %v2307
    %v2310 = vadd.f32 %v2302, %v2308
    %v2311 = vlaneseq
    %v2312 = vshrl.u32 %v2311, 7
    %v2313 = vsub.s32 1, %v2312
    %v2314 = vrot.slane %v2263, %v2313
    %v2315 = vlaneseq
    %v2316 = vshrl.u32 %v2315, 7
    %v2317 = vsub.s32 3, %v2316
    %v2318 = vrot.slane %v2263, %v2317
    %v2319 = vlaneseq
    %v2320 = vshrl.u32 %v2319, 7
    %v2321 = vsub.s32 5, %v2320
    %v2322 = vrot.slane %v2263, %v2321
    %v2326 = vlaneseq
    %v2327 = vshrl.u32 %v2326, 7
    %v2328 = vsub.s32 1, %v2327
    %v2329 = vrot.slane %v2314, %v2328
    %v2330 = vlaneseq
    %v2331 = vshrl.u32 %v2330, 7
    %v2332 = vsub.s32 1, %v2331
    %v2333 = vrot.slane %v2318, %v2332
    %v2334 = vlaneseq
    %v2335 = vshrl.u32 %v2334, 7
    %v2336 = vsub.s32 1, %v2335
    %v2337 = vrot.slane %v2322, %v2336
    %v2338 = vmul.f32 %v2260, %v2329
    %v2339 = vmul.f32 %v2261, %v2333
    %v2340 = vmul.f32 %v2262, %v2337
    %v2341 = vsel %vm2295, %v2338, 0.0
    %v2342 = vsel %vm2295, %v2339, 0.0
    %v2343 = vadd.f32 %v2341, %v2342
    %v2344 = vsel %vm2295, %v2340, 0.0
    %v2345 = vadd.f32 %v2343, %v2344
    %2346 = vadd.xlane.f32.xlu0 %v2345
    %v2347 = vpop.xlane.xlu0 %2346
    %v2348 = vadd.f32 %v2347, %v2308
    %v2349 = vlaneseq
    %v2350 = vand.u32 %v2349, 127
    %vm2351 = vcmp.eq.s32.totalorder %v2350, 0
    %2353 = vset.pattern.permute.xlu0 0
    %2354 = vperm.xlu0 %2353, %v2310
    %v2355 = vpop.permute.xlu0 %2354
    %2358 = vset.pattern.permute.xlu0 1
    %2359 = vperm.xlu0 %2358, %v2348
    %v2360 = vpop.permute.xlu0 %2359
    %v2362 = vsel %vm2351, %v2355, %v2360
    %vm2363 = vcmask 9216
    %2364 = vst.msk [vmem:[#allocation13] sm:$0x3] %vm2363, %v2362
    // Predicated region
    $region70: #{tpu_custom_call.1} parent=1 // pred_check
      _
    $region71: #{tpu_custom_call.1} parent=1 // pred_check_branch
      %2366 = sbr.rel (0) target = $region73
    $region72: #{tpu_custom_call.1} parent=1 // pred_region
      %s2368 = ssub.s32 32, 32
      %2369 = vsyncadd [#allocation4], %s2368
      %s2371 = sshll.u32 [#allocation13], 4
      %s2372 = int_to_ptr.vmem [resolvable:$true] %s2371
      %2374 = dma.vmem_to_hbm [thread:$0]  %s2372, 32, %s11, [#allocation4]
    $region73: #{tpu_custom_call.1} parent=1 // pred_fallthru
      _
    // Predicated region
    $region74: #{tpu_custom_call.1} parent=1 // pred_check
      _
    $region75: #{tpu_custom_call.1} parent=1 // pred_check_branch
      %2376 = sbr.rel (0) target = $region77
    $region76: #{tpu_custom_call.1} parent=1 // pred_region
      %2377 = dma.done [#allocation4], 32
    $region77: #{tpu_custom_call.1} parent=1 // pred_fallthru
      _
    %2378 = vsyncpa [#allocation3], 1
    %2379 = vsyncpa [#allocation6], 1
    %2380 = vsyncpa [#allocation9], 1
    %2381 = vsyncpa [#allocation12], 1
    %2382 = vsyncpa [#allocation4], 1

</llo_original>
